<compile_context>
chip_gen: v5e
topology: v5e:2x2
jax: 0.10.0
libtpu: 0.0.40
codegen_flags: <defaults>
</compile_context>

<pallas_src>
import math
import functools

import jax
import jax.numpy as jnp
from jax import lax
from jax.experimental import pallas as pl
from jax.experimental.pallas import tpu as pltpu  # noqa: F401

_NEG_INF = jnp.float32(-1e30)   # large finite negative: avoids NaN from (-inf) - (-inf)
_LN_EPS = 1e-5


# ----------------------------- in-kernel helpers ---------------------------

def _bf16(x):
    return x.astype(jnp.bfloat16)


def _softmax_lastdim(s):
    s = s - jnp.max(s, axis=-1, keepdims=True)
    p = jnp.exp(s)
    return p * pl.reciprocal(jnp.sum(p, axis=-1, keepdims=True), approx=True)


def _layernorm(z, g, b):
    mu = jnp.mean(z, axis=-1, keepdims=True)
    var = jnp.mean(jnp.square(z - mu), axis=-1, keepdims=True)
    return (z - mu) * lax.rsqrt(var + _LN_EPS) * g + b


# ----------------------------- Pallas kernels ------------------------------

def _self_attn_block_kernel(x_ref, tgtm_ref, pad_ref, wqkv_ref, bqkv_ref,
                            wout_ref, bout_ref, g_ref, beta_ref, o_ref,
                            *, num_heads):
    """Fused: QKV proj -> per-head masked SDPA -> out proj -> +residual -> LayerNorm."""
    N, T, E = x_ref.shape
    H = num_heads
    dh = E // H

    x = x_ref[...]                                        # (N, T, E) f32
    x2 = x.reshape(N * T, E)

    qkv = jnp.dot(_bf16(x2), wqkv_ref[...],
                  preferred_element_type=jnp.float32) + bqkv_ref[...]       # (N*T, 3E)
    q = qkv[:, 0 * E:1 * E].reshape(N, T, E)              # q already scaled by 1/sqrt(dh)
    k = qkv[:, 1 * E:2 * E].reshape(N, T, E)
    v = qkv[:, 2 * E:3 * E].reshape(N, T, E)

    # additive mask built in VMEM: (T,T) causal + (N,T) key padding -> (N, T, T)
    mask = tgtm_ref[...][None, :, :] + pad_ref[...][:, None, :]

    ctx_heads = []
    for h in range(H):                                    # static unroll over heads
        sl = slice(h * dh, (h + 1) * dh)
        qh, kh, vh = _bf16(q[:, :, sl]), _bf16(k[:, :, sl]), _bf16(v[:, :, sl])
        s = jnp.einsum('ntd,nsd->nts', qh, kh,
                       preferred_element_type=jnp.float32) + mask
        p = _softmax_lastdim(s)                           # f32
        ctx_heads.append(jnp.einsum('nts,nsd->ntd', _bf16(p), vh,
                                    preferred_element_type=jnp.float32))
    ctx = jnp.concatenate(ctx_heads, axis=-1).reshape(N * T, E)

    y = jnp.dot(_bf16(ctx), wout_ref[...],
                preferred_element_type=jnp.float32) + bout_ref[...]
    out = _layernorm(x2 + y, g_ref[...], beta_ref[...])
    o_ref[...] = out.reshape(N, T, E)


def _cross_attn_block_kernel(x_ref, mem_ref, wq_ref, bq_ref, wkv_ref, bkv_ref,
                             wout_ref, bout_ref, g_ref, beta_ref,
                             o_ref, attn_ref, *, num_heads):
    """Fused: Q proj + KV proj -> per-head SDPA (+weights out) -> out proj -> +res -> LN."""
    N, T, E = x_ref.shape
    S = mem_ref.shape[1]
    H = num_heads
    dh = E // H

    x = x_ref[...]                                        # (N, T, E) f32
    x2 = x.reshape(N * T, E)
    m2 = mem_ref[...].reshape(N * S, E)

    q = (jnp.dot(_bf16(x2), wq_ref[...], preferred_element_type=jnp.float32)
         + bq_ref[...]).reshape(N, T, E)                  # pre-scaled by 1/sqrt(dh)
    kv = jnp.dot(_bf16(m2), wkv_ref[...],
                 preferred_element_type=jnp.float32) + bkv_ref[...]          # (N*S, 2E)
    k = kv[:, :E].reshape(N, S, E)
    v = kv[:, E:].reshape(N, S, E)

    ctx_heads = []
    for h in range(H):
        sl = slice(h * dh, (h + 1) * dh)
        qh, kh, vh = _bf16(q[:, :, sl]), _bf16(k[:, :, sl]), _bf16(v[:, :, sl])
        s = jnp.einsum('ntd,nsd->nts', qh, kh, preferred_element_type=jnp.float32)
        p = _softmax_lastdim(s)                           # (N, T, S) f32
        attn_ref[h] = p                                   # per-head weights (avg=False)
        ctx_heads.append(jnp.einsum('nts,nsd->ntd', _bf16(p), vh,
                                    preferred_element_type=jnp.float32))
    ctx = jnp.concatenate(ctx_heads, axis=-1).reshape(N * T, E)

    y = jnp.dot(_bf16(ctx), wout_ref[...],
                preferred_element_type=jnp.float32) + bout_ref[...]
    out = _layernorm(x2 + y, g_ref[...], beta_ref[...])
    o_ref[...] = out.reshape(N, T, E)


def _ff_block_kernel(x_ref, w1_ref, b1_ref, w2_ref, b2_ref, g_ref, beta_ref, o_ref):
    """Fused: Linear -> ReLU -> Linear -> +residual -> LayerNorm (hidden never leaves VMEM)."""
    N, T, E = x_ref.shape
    x = x_ref[...]
    x2 = x.reshape(N * T, E)
    h = jnp.dot(_bf16(x2), w1_ref[...], preferred_element_type=jnp.float32) + b1_ref[...]
    h = jnp.maximum(h, 0.0)
    y = jnp.dot(_bf16(h), w2_ref[...], preferred_element_type=jnp.float32) + b2_ref[...]
    out = _layernorm(x2 + y, g_ref[...], beta_ref[...])
    o_ref[...] = out.reshape(N, T, E)


# ----------------------------- wrappers ------------------------------------

def self_attention_block(x, tgt_mask_add, key_pad_add, pp, num_heads):
    N, T, E = x.shape
    return pl.pallas_call(
        functools.partial(_self_attn_block_kernel, num_heads=num_heads),
        out_shape=jax.ShapeDtypeStruct((N, T, E), jnp.float32),
    )(x, tgt_mask_add, key_pad_add,
      pp["sa_w_qkv"], pp["sa_b_qkv"], pp["sa_w_out"], pp["sa_b_out"],
      pp["ln1_g"], pp["ln1_b"])


def cross_attention_block(x, mem, pp, num_heads):
    N, T, E = x.shape
    S = mem.shape[1]
    out, attn = pl.pallas_call(
        functools.partial(_cross_attn_block_kernel, num_heads=num_heads),
        out_shape=(jax.ShapeDtypeStruct((N, T, E), jnp.float32),
                   jax.ShapeDtypeStruct((num_heads, N, T, S), jnp.float32)),
    )(x, mem,
      pp["ca_w_q"], pp["ca_b_q"], pp["ca_w_kv"], pp["ca_b_kv"],
      pp["ca_w_out"], pp["ca_b_out"], pp["ln2_g"], pp["ln2_b"])
    return out, attn


def feedforward_block(x, pp):
    N, T, E = x.shape
    return pl.pallas_call(
        _ff_block_kernel,
        out_shape=jax.ShapeDtypeStruct((N, T, E), jnp.float32),
    )(x, pp["ff_w1"], pp["ff_b1"], pp["ff_w2"], pp["ff_b2"], pp["ln3_g"], pp["ln3_b"])


# ----------------------------- model glue ----------------------------------

def decoder_layer_forward(prep, dec_inputs, enc_outputs, tgt_mask, tgt_pad_mask, num_heads):
    """Forward of DecoderLayer (eval mode). Returns ((T,N,E) output, (N,H,T,S) cross-attn weights)."""
    # one batch-major transpose at the layer boundary; everything else stays in 3 fused kernels
    x = jnp.transpose(dec_inputs, (1, 0, 2))                 # (N, T, E)
    mem = jnp.transpose(enc_outputs, (1, 0, 2))              # (N, S, E)

    tgt_mask_add = jnp.maximum(tgt_mask.astype(jnp.float32), _NEG_INF)     # clamp -inf
    key_pad_add = jnp.where(tgt_pad_mask, _NEG_INF, jnp.float32(0.0))      # (N, T)

    # TODO(synk): dropout layers are identity (eval-mode forward only).
    x1 = self_attention_block(x, tgt_mask_add, key_pad_add, prep, num_heads)
    x2, attn_hn = cross_attention_block(x1, mem, prep, num_heads)
    x3 = feedforward_block(x2, prep)

    out = jnp.transpose(x3, (1, 0, 2))                       # (T, N, E)
    attns = jnp.transpose(attn_hn, (1, 0, 2, 3))             # (N, H, T, S)
    return out, attns


# ----------------------------- parameters ----------------------------------

def init_params(key, d_model, num_heads, ff_dim):
    """Parameters in native PyTorch (out_features, in_features) layout."""
    ks = jax.random.split(key, 8)
    s = 0.02
    return {
        "sa_in_w":  jax.random.normal(ks[0], (3 * d_model, d_model), jnp.float32) * s,
        "sa_in_b":  jnp.zeros((3 * d_model,), jnp.float32),
        "sa_out_w": jax.random.normal(ks[1], (d_model, d_model), jnp.float32) * s,
        "sa_out_b": jnp.zeros((d_model,), jnp.float32),
        "ca_in_w":  jax.random.normal(ks[2], (3 * d_model, d_model), jnp.float32) * s,
        "ca_in_b":  jnp.zeros((3 * d_model,), jnp.float32),
        "ca_out_w": jax.random.normal(ks[3], (d_model, d_model), jnp.float32) * s,
        "ca_out_b": jnp.zeros((d_model,), jnp.float32),
        "ln1_g": jnp.ones((d_model,), jnp.float32), "ln1_b": jnp.zeros((d_model,), jnp.float32),
        "ln2_g": jnp.ones((d_model,), jnp.float32), "ln2_b": jnp.zeros((d_model,), jnp.float32),
        "ln3_g": jnp.ones((d_model,), jnp.float32), "ln3_b": jnp.zeros((d_model,), jnp.float32),
        "ff1_w": jax.random.normal(ks[4], (ff_dim, d_model), jnp.float32) * s,
        "ff1_b": jnp.zeros((ff_dim,), jnp.float32),
        "ff2_w": jax.random.normal(ks[5], (d_model, ff_dim), jnp.float32) * s,
        "ff2_b": jnp.zeros((d_model,), jnp.float32),
    }


def prepare_params(p, d_model, num_heads):
    """One-time host-side transform: transpose (out,in)->(in,out), cast matmul weights to bf16,
    fold the 1/sqrt(dh) q-scale into the Q projection, reshape bias/LN vectors to (1, n) f32."""
    E = d_model
    dh = E // num_heads
    scale = 1.0 / math.sqrt(dh)

    def mat(w):                       # MXU operand: (in, out), bf16
        return jnp.asarray(w, jnp.float32).T.astype(jnp.bfloat16)

    def vec(b):                       # f32 row for in-kernel broadcast
        b = jnp.asarray(b, jnp.float32)
        return b.reshape(1, b.shape[0])

    sa_w = jnp.asarray(p["sa_in_w"], jnp.float32).at[:E].multiply(scale)
    sa_b = jnp.asarray(p["sa_in_b"], jnp.float32).at[:E].multiply(scale)
    ca_w = jnp.asarray(p["ca_in_w"], jnp.float32)
    ca_b = jnp.asarray(p["ca_in_b"], jnp.float32)

    return {
        "sa_w_qkv": mat(sa_w), "sa_b_qkv": vec(sa_b),
        "sa_w_out": mat(p["sa_out_w"]), "sa_b_out": vec(p["sa_out_b"]),
        "ln1_g": vec(p["ln1_g"]), "ln1_b": vec(p["ln1_b"]),
        "ca_w_q": mat(ca_w[:E] * scale), "ca_b_q": vec(ca_b[:E] * scale),
        "ca_w_kv": mat(ca_w[E:]), "ca_b_kv": vec(ca_b[E:]),
        "ca_w_out": mat(p["ca_out_w"]), "ca_b_out": vec(p["ca_out_b"]),
        "ln2_g": vec(p["ln2_g"]), "ln2_b": vec(p["ln2_b"]),
        "ff_w1": mat(p["ff1_w"]), "ff_b1": vec(p["ff1_b"]),
        "ff_w2": mat(p["ff2_w"]), "ff_b2": vec(p["ff2_b"]),
        "ln3_g": vec(p["ln3_g"]), "ln3_b": vec(p["ln3_b"]),
    }


if __name__ == "__main__":
    d_model, num_heads, ff_dim = 32, 4, 64
    T, S, N = 8, 10, 2   # target len, source len, batch

    key = jax.random.PRNGKey(0)
    k_par, k_dec, k_enc = jax.random.split(key, 3)
    params = init_params(k_par, d_model, num_heads, ff_dim)
    prep = prepare_params(params, d_model, num_heads)        # one-time layout/dtype transform

    dec_inputs = jax.random.normal(k_dec, (T, N, d_model), jnp.float32)
    enc_outputs = jax.random.normal(k_enc, (S, N, d_model), jnp.float32)

    # causal additive mask (0 below/on diag, -inf above), like torch generate_square_subsequent_mask
    tgt_mask = jnp.where(jnp.triu(jnp.ones((T, T), bool), k=1), -jnp.inf, 0.0).astype(jnp.float32)
    # key padding mask: pad the last target position of batch 1
    tgt_pad_mask = jnp.zeros((N, T), bool).at[1, T - 1].set(True)

    fwd = jax.jit(functools.partial(decoder_layer_forward, num_heads=num_heads))
    out, attns = fwd(prep, dec_inputs, enc_outputs, tgt_mask, tgt_pad_mask)
    jax.block_until_ready((out, attns))

    assert out.shape == (T, N, d_model)
    assert attns.shape == (N, num_heads, T, S)
    assert bool(jnp.all(jnp.isfinite(out))) and bool(jnp.all(jnp.isfinite(attns)))
    print("KERNEL_OK")
</pallas_src>

<mosaic_0001>
module attributes {stable_mosaic.version = 11 : i64} {
  func.func @_self_attn_block_kernel(%arg0: memref<2x8x32xf32, #tpu.memory_space<vmem>>, %arg1: memref<8x8xf32, #tpu.memory_space<vmem>>, %arg2: memref<2x8xf32, #tpu.memory_space<vmem>>, %arg3: memref<32x96xbf16, #tpu.memory_space<vmem>>, %arg4: memref<1x96xf32, #tpu.memory_space<vmem>>, %arg5: memref<32x32xbf16, #tpu.memory_space<vmem>>, %arg6: memref<1x32xf32, #tpu.memory_space<vmem>>, %arg7: memref<1x32xf32, #tpu.memory_space<vmem>>, %arg8: memref<1x32xf32, #tpu.memory_space<vmem>>, %arg9: memref<2x8x32xf32, #tpu.memory_space<vmem>>) attributes {dimension_semantics = [], scalar_prefetch = 0 : i64, scratch_operands = 0 : i64, tpu.core_type = #tpu.core_type<tc>} {
    %c0 = arith.constant 0 : index
    %c0_0 = arith.constant 0 : index
    %c0_1 = arith.constant 0 : index
    %0 = vector.load %arg0[%c0, %c0_0, %c0_1] : memref<2x8x32xf32, #tpu.memory_space<vmem>>, vector<2x8x32xf32>
    %1 = vector.shape_cast %0 : vector<2x8x32xf32> to vector<16x32xf32>
    %2 = arith.truncf %1 : vector<16x32xf32> to vector<16x32xbf16>
    %c0_2 = arith.constant 0 : index
    %c0_3 = arith.constant 0 : index
    %3 = vector.load %arg3[%c0_2, %c0_3] : memref<32x96xbf16, #tpu.memory_space<vmem>>, vector<32x96xbf16>
    %cst = arith.constant dense<0.000000e+00> : vector<16x96xf32>
    %4 = tpu.matmul %2, %3, %cst {dimension_numbers = #tpu.dot_dimension_numbers<[1], [0], [0], [1], [0, 0, 1, 1], [], []>} : vector<16x32xbf16>, vector<32x96xbf16>, vector<16x96xf32> -> vector<16x96xf32>
    %c0_4 = arith.constant 0 : index
    %c0_5 = arith.constant 0 : index
    %5 = vector.load %arg4[%c0_4, %c0_5] : memref<1x96xf32, #tpu.memory_space<vmem>>, vector<1x96xf32>
    %6 = vector.broadcast %5 : vector<1x96xf32> to vector<16x96xf32>
    %7 = arith.addf %4, %6 : vector<16x96xf32>
    %8 = vector.extract_strided_slice %7 {offsets = [0, 0], sizes = [16, 32], strides = [1, 1]} : vector<16x96xf32> to vector<16x32xf32>
    %9 = vector.shape_cast %8 : vector<16x32xf32> to vector<2x8x32xf32>
    %10 = vector.extract_strided_slice %7 {offsets = [0, 32], sizes = [16, 32], strides = [1, 1]} : vector<16x96xf32> to vector<16x32xf32>
    %11 = vector.shape_cast %10 : vector<16x32xf32> to vector<2x8x32xf32>
    %12 = vector.extract_strided_slice %7 {offsets = [0, 64], sizes = [16, 32], strides = [1, 1]} : vector<16x96xf32> to vector<16x32xf32>
    %13 = vector.shape_cast %12 : vector<16x32xf32> to vector<2x8x32xf32>
    %c0_6 = arith.constant 0 : index
    %c0_7 = arith.constant 0 : index
    %14 = vector.load %arg1[%c0_6, %c0_7] : memref<8x8xf32, #tpu.memory_space<vmem>>, vector<8x8xf32>
    %15 = vector.shape_cast %14 : vector<8x8xf32> to vector<1x8x8xf32>
    %c0_8 = arith.constant 0 : index
    %c0_9 = arith.constant 0 : index
    %16 = vector.load %arg2[%c0_8, %c0_9] : memref<2x8xf32, #tpu.memory_space<vmem>>, vector<2x8xf32>
    %17 = vector.shape_cast %16 : vector<2x8xf32> to vector<2x1x8xf32>
    %18 = vector.broadcast %15 : vector<1x8x8xf32> to vector<2x8x8xf32>
    %19 = vector.broadcast %17 : vector<2x1x8xf32> to vector<2x8x8xf32>
    %20 = arith.addf %18, %19 : vector<2x8x8xf32>
    %21 = vector.extract_strided_slice %9 {offsets = [0, 0, 0], sizes = [2, 8, 8], strides = [1, 1, 1]} : vector<2x8x32xf32> to vector<2x8x8xf32>
    %22 = arith.truncf %21 : vector<2x8x8xf32> to vector<2x8x8xbf16>
    %23 = vector.extract_strided_slice %11 {offsets = [0, 0, 0], sizes = [2, 8, 8], strides = [1, 1, 1]} : vector<2x8x32xf32> to vector<2x8x8xf32>
    %24 = arith.truncf %23 : vector<2x8x8xf32> to vector<2x8x8xbf16>
    %25 = vector.extract_strided_slice %13 {offsets = [0, 0, 0], sizes = [2, 8, 8], strides = [1, 1, 1]} : vector<2x8x32xf32> to vector<2x8x8xf32>
    %26 = arith.truncf %25 : vector<2x8x8xf32> to vector<2x8x8xbf16>
    "tpu.trace_start"() <{level = 10 : i32, message = "ntd,nsd->nts"}> : () -> ()
    %cst_10 = arith.constant dense<0.000000e+00> : vector<2x8x8xf32>
    %27 = tpu.matmul %22, %24, %cst_10 {dimension_numbers = #tpu.dot_dimension_numbers<[2], [2], [1], [1], [0, 0, 0, 1, 1, 1], [0], [0]>} : vector<2x8x8xbf16>, vector<2x8x8xbf16>, vector<2x8x8xf32> -> vector<2x8x8xf32>
    "tpu.trace_stop"() : () -> ()
    %28 = arith.addf %27, %20 : vector<2x8x8xf32>
    %cst_11 = arith.constant dense<0xFF800000> : vector<2x8xf32>
    %29 = vector.multi_reduction <maximumf>, %28, %cst_11 [2] : vector<2x8x8xf32> to vector<2x8xf32>
    %30 = vector.shape_cast %29 : vector<2x8xf32> to vector<2x8x1xf32>
    %31 = vector.broadcast %30 : vector<2x8x1xf32> to vector<2x8x8xf32>
    %32 = arith.subf %28, %31 : vector<2x8x8xf32>
    %33 = math.exp %32 : vector<2x8x8xf32>
    %cst_12 = arith.constant dense<0.000000e+00> : vector<2x8xf32>
    %34 = vector.multi_reduction <add>, %33, %cst_12 [2] : vector<2x8x8xf32> to vector<2x8xf32>
    %35 = vector.shape_cast %34 : vector<2x8xf32> to vector<2x8x1xf32>
    %36 = tpu.reciprocal %35 {approx = true} : vector<2x8x1xf32> -> vector<2x8x1xf32>
    %37 = vector.broadcast %36 : vector<2x8x1xf32> to vector<2x8x8xf32>
    %38 = arith.mulf %33, %37 : vector<2x8x8xf32>
    %39 = arith.truncf %38 : vector<2x8x8xf32> to vector<2x8x8xbf16>
    "tpu.trace_start"() <{level = 10 : i32, message = "nts,nsd->ntd"}> : () -> ()
    %cst_13 = arith.constant dense<0.000000e+00> : vector<2x8x8xf32>
    %40 = tpu.matmul %39, %26, %cst_13 {dimension_numbers = #tpu.dot_dimension_numbers<[2], [1], [1], [2], [0, 0, 0, 1, 1, 2], [0], [0]>} : vector<2x8x8xbf16>, vector<2x8x8xbf16>, vector<2x8x8xf32> -> vector<2x8x8xf32>
    "tpu.trace_stop"() : () -> ()
    %41 = vector.extract_strided_slice %9 {offsets = [0, 0, 8], sizes = [2, 8, 8], strides = [1, 1, 1]} : vector<2x8x32xf32> to vector<2x8x8xf32>
    %42 = arith.truncf %41 : vector<2x8x8xf32> to vector<2x8x8xbf16>
    %43 = vector.extract_strided_slice %11 {offsets = [0, 0, 8], sizes = [2, 8, 8], strides = [1, 1, 1]} : vector<2x8x32xf32> to vector<2x8x8xf32>
    %44 = arith.truncf %43 : vector<2x8x8xf32> to vector<2x8x8xbf16>
    %45 = vector.extract_strided_slice %13 {offsets = [0, 0, 8], sizes = [2, 8, 8], strides = [1, 1, 1]} : vector<2x8x32xf32> to vector<2x8x8xf32>
    %46 = arith.truncf %45 : vector<2x8x8xf32> to vector<2x8x8xbf16>
    "tpu.trace_start"() <{level = 10 : i32, message = "ntd,nsd->nts"}> : () -> ()
    %cst_14 = arith.constant dense<0.000000e+00> : vector<2x8x8xf32>
    %47 = tpu.matmul %42, %44, %cst_14 {dimension_numbers = #tpu.dot_dimension_numbers<[2], [2], [1], [1], [0, 0, 0, 1, 1, 1], [0], [0]>} : vector<2x8x8xbf16>, vector<2x8x8xbf16>, vector<2x8x8xf32> -> vector<2x8x8xf32>
    "tpu.trace_stop"() : () -> ()
    %48 = arith.addf %47, %20 : vector<2x8x8xf32>
    %cst_15 = arith.constant dense<0xFF800000> : vector<2x8xf32>
    %49 = vector.multi_reduction <maximumf>, %48, %cst_15 [2] : vector<2x8x8xf32> to vector<2x8xf32>
    %50 = vector.shape_cast %49 : vector<2x8xf32> to vector<2x8x1xf32>
    %51 = vector.broadcast %50 : vector<2x8x1xf32> to vector<2x8x8xf32>
    %52 = arith.subf %48, %51 : vector<2x8x8xf32>
    %53 = math.exp %52 : vector<2x8x8xf32>
    %cst_16 = arith.constant dense<0.000000e+00> : vector<2x8xf32>
    %54 = vector.multi_reduction <add>, %53, %cst_16 [2] : vector<2x8x8xf32> to vector<2x8xf32>
    %55 = vector.shape_cast %54 : vector<2x8xf32> to vector<2x8x1xf32>
    %56 = tpu.reciprocal %55 {approx = true} : vector<2x8x1xf32> -> vector<2x8x1xf32>
    %57 = vector.broadcast %56 : vector<2x8x1xf32> to vector<2x8x8xf32>
    %58 = arith.mulf %53, %57 : vector<2x8x8xf32>
    %59 = arith.truncf %58 : vector<2x8x8xf32> to vector<2x8x8xbf16>
    "tpu.trace_start"() <{level = 10 : i32, message = "nts,nsd->ntd"}> : () -> ()
    %cst_17 = arith.constant dense<0.000000e+00> : vector<2x8x8xf32>
    %60 = tpu.matmul %59, %46, %cst_17 {dimension_numbers = #tpu.dot_dimension_numbers<[2], [1], [1], [2], [0, 0, 0, 1, 1, 2], [0], [0]>} : vector<2x8x8xbf16>, vector<2x8x8xbf16>, vector<2x8x8xf32> -> vector<2x8x8xf32>
    "tpu.trace_stop"() : () -> ()
    %61 = vector.extract_strided_slice %9 {offsets = [0, 0, 16], sizes = [2, 8, 8], strides = [1, 1, 1]} : vector<2x8x32xf32> to vector<2x8x8xf32>
    %62 = arith.truncf %61 : vector<2x8x8xf32> to vector<2x8x8xbf16>
    %63 = vector.extract_strided_slice %11 {offsets = [0, 0, 16], sizes = [2, 8, 8], strides = [1, 1, 1]} : vector<2x8x32xf32> to vector<2x8x8xf32>
    %64 = arith.truncf %63 : vector<2x8x8xf32> to vector<2x8x8xbf16>
    %65 = vector.extract_strided_slice %13 {offsets = [0, 0, 16], sizes = [2, 8, 8], strides = [1, 1, 1]} : vector<2x8x32xf32> to vector<2x8x8xf32>
    %66 = arith.truncf %65 : vector<2x8x8xf32> to vector<2x8x8xbf16>
    "tpu.trace_start"() <{level = 10 : i32, message = "ntd,nsd->nts"}> : () -> ()
    %cst_18 = arith.constant dense<0.000000e+00> : vector<2x8x8xf32>
    %67 = tpu.matmul %62, %64, %cst_18 {dimension_numbers = #tpu.dot_dimension_numbers<[2], [2], [1], [1], [0, 0, 0, 1, 1, 1], [0], [0]>} : vector<2x8x8xbf16>, vector<2x8x8xbf16>, vector<2x8x8xf32> -> vector<2x8x8xf32>
    "tpu.trace_stop"() : () -> ()
    %68 = arith.addf %67, %20 : vector<2x8x8xf32>
    %cst_19 = arith.constant dense<0xFF800000> : vector<2x8xf32>
    %69 = vector.multi_reduction <maximumf>, %68, %cst_19 [2] : vector<2x8x8xf32> to vector<2x8xf32>
    %70 = vector.shape_cast %69 : vector<2x8xf32> to vector<2x8x1xf32>
    %71 = vector.broadcast %70 : vector<2x8x1xf32> to vector<2x8x8xf32>
    %72 = arith.subf %68, %71 : vector<2x8x8xf32>
    %73 = math.exp %72 : vector<2x8x8xf32>
    %cst_20 = arith.constant dense<0.000000e+00> : vector<2x8xf32>
    %74 = vector.multi_reduction <add>, %73, %cst_20 [2] : vector<2x8x8xf32> to vector<2x8xf32>
    %75 = vector.shape_cast %74 : vector<2x8xf32> to vector<2x8x1xf32>
    %76 = tpu.reciprocal %75 {approx = true} : vector<2x8x1xf32> -> vector<2x8x1xf32>
    %77 = vector.broadcast %76 : vector<2x8x1xf32> to vector<2x8x8xf32>
    %78 = arith.mulf %73, %77 : vector<2x8x8xf32>
    %79 = arith.truncf %78 : vector<2x8x8xf32> to vector<2x8x8xbf16>
    "tpu.trace_start"() <{level = 10 : i32, message = "nts,nsd->ntd"}> : () -> ()
    %cst_21 = arith.constant dense<0.000000e+00> : vector<2x8x8xf32>
    %80 = tpu.matmul %79, %66, %cst_21 {dimension_numbers = #tpu.dot_dimension_numbers<[2], [1], [1], [2], [0, 0, 0, 1, 1, 2], [0], [0]>} : vector<2x8x8xbf16>, vector<2x8x8xbf16>, vector<2x8x8xf32> -> vector<2x8x8xf32>
    "tpu.trace_stop"() : () -> ()
    %81 = vector.extract_strided_slice %9 {offsets = [0, 0, 24], sizes = [2, 8, 8], strides = [1, 1, 1]} : vector<2x8x32xf32> to vector<2x8x8xf32>
    %82 = arith.truncf %81 : vector<2x8x8xf32> to vector<2x8x8xbf16>
    %83 = vector.extract_strided_slice %11 {offsets = [0, 0, 24], sizes = [2, 8, 8], strides = [1, 1, 1]} : vector<2x8x32xf32> to vector<2x8x8xf32>
    %84 = arith.truncf %83 : vector<2x8x8xf32> to vector<2x8x8xbf16>
    %85 = vector.extract_strided_slice %13 {offsets = [0, 0, 24], sizes = [2, 8, 8], strides = [1, 1, 1]} : vector<2x8x32xf32> to vector<2x8x8xf32>
    %86 = arith.truncf %85 : vector<2x8x8xf32> to vector<2x8x8xbf16>
    "tpu.trace_start"() <{level = 10 : i32, message = "ntd,nsd->nts"}> : () -> ()
    %cst_22 = arith.constant dense<0.000000e+00> : vector<2x8x8xf32>
    %87 = tpu.matmul %82, %84, %cst_22 {dimension_numbers = #tpu.dot_dimension_numbers<[2], [2], [1], [1], [0, 0, 0, 1, 1, 1], [0], [0]>} : vector<2x8x8xbf16>, vector<2x8x8xbf16>, vector<2x8x8xf32> -> vector<2x8x8xf32>
    "tpu.trace_stop"() : () -> ()
    %88 = arith.addf %87, %20 : vector<2x8x8xf32>
    %cst_23 = arith.constant dense<0xFF800000> : vector<2x8xf32>
    %89 = vector.multi_reduction <maximumf>, %88, %cst_23 [2] : vector<2x8x8xf32> to vector<2x8xf32>
    %90 = vector.shape_cast %89 : vector<2x8xf32> to vector<2x8x1xf32>
    %91 = vector.broadcast %90 : vector<2x8x1xf32> to vector<2x8x8xf32>
    %92 = arith.subf %88, %91 : vector<2x8x8xf32>
    %93 = math.exp %92 : vector<2x8x8xf32>
    %cst_24 = arith.constant dense<0.000000e+00> : vector<2x8xf32>
    %94 = vector.multi_reduction <add>, %93, %cst_24 [2] : vector<2x8x8xf32> to vector<2x8xf32>
    %95 = vector.shape_cast %94 : vector<2x8xf32> to vector<2x8x1xf32>
    %96 = tpu.reciprocal %95 {approx = true} : vector<2x8x1xf32> -> vector<2x8x1xf32>
    %97 = vector.broadcast %96 : vector<2x8x1xf32> to vector<2x8x8xf32>
    %98 = arith.mulf %93, %97 : vector<2x8x8xf32>
    %99 = arith.truncf %98 : vector<2x8x8xf32> to vector<2x8x8xbf16>
    "tpu.trace_start"() <{level = 10 : i32, message = "nts,nsd->ntd"}> : () -> ()
    %cst_25 = arith.constant dense<0.000000e+00> : vector<2x8x8xf32>
    %100 = tpu.matmul %99, %86, %cst_25 {dimension_numbers = #tpu.dot_dimension_numbers<[2], [1], [1], [2], [0, 0, 0, 1, 1, 2], [0], [0]>} : vector<2x8x8xbf16>, vector<2x8x8xbf16>, vector<2x8x8xf32> -> vector<2x8x8xf32>
    "tpu.trace_stop"() : () -> ()
    %101 = tpu.concatenate %40, %60, %80, %100 in 2 : vector<2x8x8xf32>, vector<2x8x8xf32>, vector<2x8x8xf32>, vector<2x8x8xf32> -> vector<2x8x32xf32>
    %102 = vector.shape_cast %101 : vector<2x8x32xf32> to vector<16x32xf32>
    %103 = arith.truncf %102 : vector<16x32xf32> to vector<16x32xbf16>
    %c0_26 = arith.constant 0 : index
    %c0_27 = arith.constant 0 : index
    %104 = vector.load %arg5[%c0_26, %c0_27] : memref<32x32xbf16, #tpu.memory_space<vmem>>, vector<32x32xbf16>
    %cst_28 = arith.constant dense<0.000000e+00> : vector<16x32xf32>
    %105 = tpu.matmul %103, %104, %cst_28 {dimension_numbers = #tpu.dot_dimension_numbers<[1], [0], [0], [1], [0, 0, 1, 1], [], []>} : vector<16x32xbf16>, vector<32x32xbf16>, vector<16x32xf32> -> vector<16x32xf32>
    %c0_29 = arith.constant 0 : index
    %c0_30 = arith.constant 0 : index
    %106 = vector.load %arg6[%c0_29, %c0_30] : memref<1x32xf32, #tpu.memory_space<vmem>>, vector<1x32xf32>
    %107 = vector.broadcast %106 : vector<1x32xf32> to vector<16x32xf32>
    %108 = arith.addf %105, %107 : vector<16x32xf32>
    %109 = arith.addf %1, %108 : vector<16x32xf32>
    %c0_31 = arith.constant 0 : index
    %c0_32 = arith.constant 0 : index
    %110 = vector.load %arg7[%c0_31, %c0_32] : memref<1x32xf32, #tpu.memory_space<vmem>>, vector<1x32xf32>
    %c0_33 = arith.constant 0 : index
    %c0_34 = arith.constant 0 : index
    %111 = vector.load %arg8[%c0_33, %c0_34] : memref<1x32xf32, #tpu.memory_space<vmem>>, vector<1x32xf32>
    %cst_35 = arith.constant dense<0.000000e+00> : vector<16xf32>
    %112 = vector.multi_reduction <add>, %109, %cst_35 [1] : vector<16x32xf32> to vector<16xf32>
    %113 = vector.shape_cast %112 : vector<16xf32> to vector<16x1xf32>
    %cst_36 = arith.constant 3.200000e+01 : f32
    %114 = vector.broadcast %cst_36 : f32 to vector<16x1xf32>
    %115 = arith.divf %113, %114 : vector<16x1xf32>
    %116 = vector.broadcast %115 : vector<16x1xf32> to vector<16x32xf32>
    %117 = arith.subf %109, %116 : vector<16x32xf32>
    %118 = arith.mulf %117, %117 : vector<16x32xf32>
    %cst_37 = arith.constant dense<0.000000e+00> : vector<16xf32>
    %119 = vector.multi_reduction <add>, %118, %cst_37 [1] : vector<16x32xf32> to vector<16xf32>
    %120 = vector.shape_cast %119 : vector<16xf32> to vector<16x1xf32>
    %cst_38 = arith.constant 3.200000e+01 : f32
    %121 = vector.broadcast %cst_38 : f32 to vector<16x1xf32>
    %122 = arith.divf %120, %121 : vector<16x1xf32>
    %123 = vector.broadcast %115 : vector<16x1xf32> to vector<16x32xf32>
    %124 = arith.subf %109, %123 : vector<16x32xf32>
    %cst_39 = arith.constant 9.99999974E-6 : f32
    %125 = vector.broadcast %cst_39 : f32 to vector<16x1xf32>
    %126 = arith.addf %122, %125 : vector<16x1xf32>
    %127 = math.rsqrt %126 : vector<16x1xf32>
    %128 = vector.broadcast %127 : vector<16x1xf32> to vector<16x32xf32>
    %129 = arith.mulf %124, %128 : vector<16x32xf32>
    %130 = vector.broadcast %110 : vector<1x32xf32> to vector<16x32xf32>
    %131 = arith.mulf %129, %130 : vector<16x32xf32>
    %132 = vector.broadcast %111 : vector<1x32xf32> to vector<16x32xf32>
    %133 = arith.addf %131, %132 : vector<16x32xf32>
    %134 = vector.shape_cast %133 : vector<16x32xf32> to vector<2x8x32xf32>
    %c0_40 = arith.constant 0 : index
    %c0_41 = arith.constant 0 : index
    %c0_42 = arith.constant 0 : index
    %135 = vector.load %arg9[%c0_40, %c0_41, %c0_42] : memref<2x8x32xf32, #tpu.memory_space<vmem>>, vector<2x8x32xf32>
    tpu.vector_store %arg9[%c0_40, %c0_41, %c0_42], %134 {strides = array<i32>} : memref<2x8x32xf32, #tpu.memory_space<vmem>>, vector<2x8x32xf32>,
    return
  }
}

module attributes {stable_mosaic.version = 11 : i64} {
  func.func @_cross_attn_block_kernel(%arg0: memref<2x8x32xf32, #tpu.memory_space<vmem>>, %arg1: memref<2x10x32xf32, #tpu.memory_space<vmem>>, %arg2: memref<32x32xbf16, #tpu.memory_space<vmem>>, %arg3: memref<1x32xf32, #tpu.memory_space<vmem>>, %arg4: memref<32x64xbf16, #tpu.memory_space<vmem>>, %arg5: memref<1x64xf32, #tpu.memory_space<vmem>>, %arg6: memref<32x32xbf16, #tpu.memory_space<vmem>>, %arg7: memref<1x32xf32, #tpu.memory_space<vmem>>, %arg8: memref<1x32xf32, #tpu.memory_space<vmem>>, %arg9: memref<1x32xf32, #tpu.memory_space<vmem>>, %arg10: memref<2x8x32xf32, #tpu.memory_space<vmem>>, %arg11: memref<4x2x8x10xf32, #tpu.memory_space<vmem>>) attributes {dimension_semantics = [], scalar_prefetch = 0 : i64, scratch_operands = 0 : i64, tpu.core_type = #tpu.core_type<tc>} {
    %c0 = arith.constant 0 : index
    %c0_0 = arith.constant 0 : index
    %c0_1 = arith.constant 0 : index
    %0 = vector.load %arg0[%c0, %c0_0, %c0_1] : memref<2x8x32xf32, #tpu.memory_space<vmem>>, vector<2x8x32xf32>
    %1 = vector.shape_cast %0 : vector<2x8x32xf32> to vector<16x32xf32>
    %c0_2 = arith.constant 0 : index
    %c0_3 = arith.constant 0 : index
    %c0_4 = arith.constant 0 : index
    %2 = vector.load %arg1[%c0_2, %c0_3, %c0_4] : memref<2x10x32xf32, #tpu.memory_space<vmem>>, vector<2x10x32xf32>
    %3 = vector.shape_cast %2 : vector<2x10x32xf32> to vector<20x32xf32>
    %4 = arith.truncf %1 : vector<16x32xf32> to vector<16x32xbf16>
    %c0_5 = arith.constant 0 : index
    %c0_6 = arith.constant 0 : index
    %5 = vector.load %arg2[%c0_5, %c0_6] : memref<32x32xbf16, #tpu.memory_space<vmem>>, vector<32x32xbf16>
    %cst = arith.constant dense<0.000000e+00> : vector<16x32xf32>
    %6 = tpu.matmul %4, %5, %cst {dimension_numbers = #tpu.dot_dimension_numbers<[1], [0], [0], [1], [0, 0, 1, 1], [], []>} : vector<16x32xbf16>, vector<32x32xbf16>, vector<16x32xf32> -> vector<16x32xf32>
    %c0_7 = arith.constant 0 : index
    %c0_8 = arith.constant 0 : index
    %7 = vector.load %arg3[%c0_7, %c0_8] : memref<1x32xf32, #tpu.memory_space<vmem>>, vector<1x32xf32>
    %8 = vector.broadcast %7 : vector<1x32xf32> to vector<16x32xf32>
    %9 = arith.addf %6, %8 : vector<16x32xf32>
    %10 = vector.shape_cast %9 : vector<16x32xf32> to vector<2x8x32xf32>
    %11 = arith.truncf %3 : vector<20x32xf32> to vector<20x32xbf16>
    %c0_9 = arith.constant 0 : index
    %c0_10 = arith.constant 0 : index
    %12 = vector.load %arg4[%c0_9, %c0_10] : memref<32x64xbf16, #tpu.memory_space<vmem>>, vector<32x64xbf16>
    %cst_11 = arith.constant dense<0.000000e+00> : vector<20x64xf32>
    %13 = tpu.matmul %11, %12, %cst_11 {dimension_numbers = #tpu.dot_dimension_numbers<[1], [0], [0], [1], [0, 0, 1, 1], [], []>} : vector<20x32xbf16>, vector<32x64xbf16>, vector<20x64xf32> -> vector<20x64xf32>
    %c0_12 = arith.constant 0 : index
    %c0_13 = arith.constant 0 : index
    %14 = vector.load %arg5[%c0_12, %c0_13] : memref<1x64xf32, #tpu.memory_space<vmem>>, vector<1x64xf32>
    %15 = vector.broadcast %14 : vector<1x64xf32> to vector<20x64xf32>
    %16 = arith.addf %13, %15 : vector<20x64xf32>
    %17 = vector.extract_strided_slice %16 {offsets = [0, 0], sizes = [20, 32], strides = [1, 1]} : vector<20x64xf32> to vector<20x32xf32>
    %18 = vector.shape_cast %17 : vector<20x32xf32> to vector<2x10x32xf32>
    %19 = vector.extract_strided_slice %16 {offsets = [0, 32], sizes = [20, 32], strides = [1, 1]} : vector<20x64xf32> to vector<20x32xf32>
    %20 = vector.shape_cast %19 : vector<20x32xf32> to vector<2x10x32xf32>
    %21 = vector.extract_strided_slice %10 {offsets = [0, 0, 0], sizes = [2, 8, 8], strides = [1, 1, 1]} : vector<2x8x32xf32> to vector<2x8x8xf32>
    %22 = arith.truncf %21 : vector<2x8x8xf32> to vector<2x8x8xbf16>
    %23 = vector.extract_strided_slice %18 {offsets = [0, 0, 0], sizes = [2, 10, 8], strides = [1, 1, 1]} : vector<2x10x32xf32> to vector<2x10x8xf32>
    %24 = arith.truncf %23 : vector<2x10x8xf32> to vector<2x10x8xbf16>
    %25 = vector.extract_strided_slice %20 {offsets = [0, 0, 0], sizes = [2, 10, 8], strides = [1, 1, 1]} : vector<2x10x32xf32> to vector<2x10x8xf32>
    %26 = arith.truncf %25 : vector<2x10x8xf32> to vector<2x10x8xbf16>
    "tpu.trace_start"() <{level = 10 : i32, message = "ntd,nsd->nts"}> : () -> ()
    %cst_14 = arith.constant dense<0.000000e+00> : vector<2x8x10xf32>
    %27 = tpu.matmul %22, %24, %cst_14 {dimension_numbers = #tpu.dot_dimension_numbers<[2], [2], [1], [1], [0, 0, 0, 1, 1, 1], [0], [0]>} : vector<2x8x8xbf16>, vector<2x10x8xbf16>, vector<2x8x10xf32> -> vector<2x8x10xf32>
    "tpu.trace_stop"() : () -> ()
    %cst_15 = arith.constant dense<0xFF800000> : vector<2x8xf32>
    %28 = vector.multi_reduction <maximumf>, %27, %cst_15 [2] : vector<2x8x10xf32> to vector<2x8xf32>
    %29 = vector.shape_cast %28 : vector<2x8xf32> to vector<2x8x1xf32>
    %30 = vector.broadcast %29 : vector<2x8x1xf32> to vector<2x8x10xf32>
    %31 = arith.subf %27, %30 : vector<2x8x10xf32>
    %32 = math.exp %31 : vector<2x8x10xf32>
    %cst_16 = arith.constant dense<0.000000e+00> : vector<2x8xf32>
    %33 = vector.multi_reduction <add>, %32, %cst_16 [2] : vector<2x8x10xf32> to vector<2x8xf32>
    %34 = vector.shape_cast %33 : vector<2x8xf32> to vector<2x8x1xf32>
    %35 = tpu.reciprocal %34 {approx = true} : vector<2x8x1xf32> -> vector<2x8x1xf32>
    %36 = vector.broadcast %35 : vector<2x8x1xf32> to vector<2x8x10xf32>
    %37 = arith.mulf %32, %36 : vector<2x8x10xf32>
    %c0_17 = arith.constant 0 : index
    %c0_18 = arith.constant 0 : index
    %c0_19 = arith.constant 0 : index
    %c0_20 = arith.constant 0 : index
    %38 = vector.load %arg11[%c0_17, %c0_18, %c0_19, %c0_20] : memref<4x2x8x10xf32, #tpu.memory_space<vmem>>, vector<1x2x8x10xf32>
    %39 = vector.shape_cast %38 : vector<1x2x8x10xf32> to vector<2x8x10xf32>
    %40 = vector.shape_cast %37 : vector<2x8x10xf32> to vector<1x2x8x10xf32>
    tpu.vector_store %arg11[%c0_17, %c0_18, %c0_19, %c0_20], %40 {strides = array<i32>} : memref<4x2x8x10xf32, #tpu.memory_space<vmem>>, vector<1x2x8x10xf32>,
    %41 = arith.truncf %37 : vector<2x8x10xf32> to vector<2x8x10xbf16>
    "tpu.trace_start"() <{level = 10 : i32, message = "nts,nsd->ntd"}> : () -> ()
    %cst_21 = arith.constant dense<0.000000e+00> : vector<2x8x8xf32>
    %42 = tpu.matmul %41, %26, %cst_21 {dimension_numbers = #tpu.dot_dimension_numbers<[2], [1], [1], [2], [0, 0, 0, 1, 1, 2], [0], [0]>} : vector<2x8x10xbf16>, vector<2x10x8xbf16>, vector<2x8x8xf32> -> vector<2x8x8xf32>
    "tpu.trace_stop"() : () -> ()
    %43 = vector.extract_strided_slice %10 {offsets = [0, 0, 8], sizes = [2, 8, 8], strides = [1, 1, 1]} : vector<2x8x32xf32> to vector<2x8x8xf32>
    %44 = arith.truncf %43 : vector<2x8x8xf32> to vector<2x8x8xbf16>
    %45 = vector.extract_strided_slice %18 {offsets = [0, 0, 8], sizes = [2, 10, 8], strides = [1, 1, 1]} : vector<2x10x32xf32> to vector<2x10x8xf32>
    %46 = arith.truncf %45 : vector<2x10x8xf32> to vector<2x10x8xbf16>
    %47 = vector.extract_strided_slice %20 {offsets = [0, 0, 8], sizes = [2, 10, 8], strides = [1, 1, 1]} : vector<2x10x32xf32> to vector<2x10x8xf32>
    %48 = arith.truncf %47 : vector<2x10x8xf32> to vector<2x10x8xbf16>
    "tpu.trace_start"() <{level = 10 : i32, message = "ntd,nsd->nts"}> : () -> ()
    %cst_22 = arith.constant dense<0.000000e+00> : vector<2x8x10xf32>
    %49 = tpu.matmul %44, %46, %cst_22 {dimension_numbers = #tpu.dot_dimension_numbers<[2], [2], [1], [1], [0, 0, 0, 1, 1, 1], [0], [0]>} : vector<2x8x8xbf16>, vector<2x10x8xbf16>, vector<2x8x10xf32> -> vector<2x8x10xf32>
    "tpu.trace_stop"() : () -> ()
    %cst_23 = arith.constant dense<0xFF800000> : vector<2x8xf32>
    %50 = vector.multi_reduction <maximumf>, %49, %cst_23 [2] : vector<2x8x10xf32> to vector<2x8xf32>
    %51 = vector.shape_cast %50 : vector<2x8xf32> to vector<2x8x1xf32>
    %52 = vector.broadcast %51 : vector<2x8x1xf32> to vector<2x8x10xf32>
    %53 = arith.subf %49, %52 : vector<2x8x10xf32>
    %54 = math.exp %53 : vector<2x8x10xf32>
    %cst_24 = arith.constant dense<0.000000e+00> : vector<2x8xf32>
    %55 = vector.multi_reduction <add>, %54, %cst_24 [2] : vector<2x8x10xf32> to vector<2x8xf32>
    %56 = vector.shape_cast %55 : vector<2x8xf32> to vector<2x8x1xf32>
    %57 = tpu.reciprocal %56 {approx = true} : vector<2x8x1xf32> -> vector<2x8x1xf32>
    %58 = vector.broadcast %57 : vector<2x8x1xf32> to vector<2x8x10xf32>
    %59 = arith.mulf %54, %58 : vector<2x8x10xf32>
    %c1 = arith.constant 1 : index
    %c0_25 = arith.constant 0 : index
    %c0_26 = arith.constant 0 : index
    %c0_27 = arith.constant 0 : index
    %60 = vector.load %arg11[%c1, %c0_25, %c0_26, %c0_27] : memref<4x2x8x10xf32, #tpu.memory_space<vmem>>, vector<1x2x8x10xf32>
    %61 = vector.shape_cast %60 : vector<1x2x8x10xf32> to vector<2x8x10xf32>
    %62 = vector.shape_cast %59 : vector<2x8x10xf32> to vector<1x2x8x10xf32>
    tpu.vector_store %arg11[%c1, %c0_25, %c0_26, %c0_27], %62 {strides = array<i32>} : memref<4x2x8x10xf32, #tpu.memory_space<vmem>>, vector<1x2x8x10xf32>,
    %63 = arith.truncf %59 : vector<2x8x10xf32> to vector<2x8x10xbf16>
    "tpu.trace_start"() <{level = 10 : i32, message = "nts,nsd->ntd"}> : () -> ()
    %cst_28 = arith.constant dense<0.000000e+00> : vector<2x8x8xf32>
    %64 = tpu.matmul %63, %48, %cst_28 {dimension_numbers = #tpu.dot_dimension_numbers<[2], [1], [1], [2], [0, 0, 0, 1, 1, 2], [0], [0]>} : vector<2x8x10xbf16>, vector<2x10x8xbf16>, vector<2x8x8xf32> -> vector<2x8x8xf32>
    "tpu.trace_stop"() : () -> ()
    %65 = vector.extract_strided_slice %10 {offsets = [0, 0, 16], sizes = [2, 8, 8], strides = [1, 1, 1]} : vector<2x8x32xf32> to vector<2x8x8xf32>
    %66 = arith.truncf %65 : vector<2x8x8xf32> to vector<2x8x8xbf16>
    %67 = vector.extract_strided_slice %18 {offsets = [0, 0, 16], sizes = [2, 10, 8], strides = [1, 1, 1]} : vector<2x10x32xf32> to vector<2x10x8xf32>
    %68 = arith.truncf %67 : vector<2x10x8xf32> to vector<2x10x8xbf16>
    %69 = vector.extract_strided_slice %20 {offsets = [0, 0, 16], sizes = [2, 10, 8], strides = [1, 1, 1]} : vector<2x10x32xf32> to vector<2x10x8xf32>
    %70 = arith.truncf %69 : vector<2x10x8xf32> to vector<2x10x8xbf16>
    "tpu.trace_start"() <{level = 10 : i32, message = "ntd,nsd->nts"}> : () -> ()
    %cst_29 = arith.constant dense<0.000000e+00> : vector<2x8x10xf32>
    %71 = tpu.matmul %66, %68, %cst_29 {dimension_numbers = #tpu.dot_dimension_numbers<[2], [2], [1], [1], [0, 0, 0, 1, 1, 1], [0], [0]>} : vector<2x8x8xbf16>, vector<2x10x8xbf16>, vector<2x8x10xf32> -> vector<2x8x10xf32>
    "tpu.trace_stop"() : () -> ()
    %cst_30 = arith.constant dense<0xFF800000> : vector<2x8xf32>
    %72 = vector.multi_reduction <maximumf>, %71, %cst_30 [2] : vector<2x8x10xf32> to vector<2x8xf32>
    %73 = vector.shape_cast %72 : vector<2x8xf32> to vector<2x8x1xf32>
    %74 = vector.broadcast %73 : vector<2x8x1xf32> to vector<2x8x10xf32>
    %75 = arith.subf %71, %74 : vector<2x8x10xf32>
    %76 = math.exp %75 : vector<2x8x10xf32>
    %cst_31 = arith.constant dense<0.000000e+00> : vector<2x8xf32>
    %77 = vector.multi_reduction <add>, %76, %cst_31 [2] : vector<2x8x10xf32> to vector<2x8xf32>
    %78 = vector.shape_cast %77 : vector<2x8xf32> to vector<2x8x1xf32>
    %79 = tpu.reciprocal %78 {approx = true} : vector<2x8x1xf32> -> vector<2x8x1xf32>
    %80 = vector.broadcast %79 : vector<2x8x1xf32> to vector<2x8x10xf32>
    %81 = arith.mulf %76, %80 : vector<2x8x10xf32>
    %c2 = arith.constant 2 : index
    %c0_32 = arith.constant 0 : index
    %c0_33 = arith.constant 0 : index
    %c0_34 = arith.constant 0 : index
    %82 = vector.load %arg11[%c2, %c0_32, %c0_33, %c0_34] : memref<4x2x8x10xf32, #tpu.memory_space<vmem>>, vector<1x2x8x10xf32>
    %83 = vector.shape_cast %82 : vector<1x2x8x10xf32> to vector<2x8x10xf32>
    %84 = vector.shape_cast %81 : vector<2x8x10xf32> to vector<1x2x8x10xf32>
    tpu.vector_store %arg11[%c2, %c0_32, %c0_33, %c0_34], %84 {strides = array<i32>} : memref<4x2x8x10xf32, #tpu.memory_space<vmem>>, vector<1x2x8x10xf32>,
    %85 = arith.truncf %81 : vector<2x8x10xf32> to vector<2x8x10xbf16>
    "tpu.trace_start"() <{level = 10 : i32, message = "nts,nsd->ntd"}> : () -> ()
    %cst_35 = arith.constant dense<0.000000e+00> : vector<2x8x8xf32>
    %86 = tpu.matmul %85, %70, %cst_35 {dimension_numbers = #tpu.dot_dimension_numbers<[2], [1], [1], [2], [0, 0, 0, 1, 1, 2], [0], [0]>} : vector<2x8x10xbf16>, vector<2x10x8xbf16>, vector<2x8x8xf32> -> vector<2x8x8xf32>
    "tpu.trace_stop"() : () -> ()
    %87 = vector.extract_strided_slice %10 {offsets = [0, 0, 24], sizes = [2, 8, 8], strides = [1, 1, 1]} : vector<2x8x32xf32> to vector<2x8x8xf32>
    %88 = arith.truncf %87 : vector<2x8x8xf32> to vector<2x8x8xbf16>
    %89 = vector.extract_strided_slice %18 {offsets = [0, 0, 24], sizes = [2, 10, 8], strides = [1, 1, 1]} : vector<2x10x32xf32> to vector<2x10x8xf32>
    %90 = arith.truncf %89 : vector<2x10x8xf32> to vector<2x10x8xbf16>
    %91 = vector.extract_strided_slice %20 {offsets = [0, 0, 24], sizes = [2, 10, 8], strides = [1, 1, 1]} : vector<2x10x32xf32> to vector<2x10x8xf32>
    %92 = arith.truncf %91 : vector<2x10x8xf32> to vector<2x10x8xbf16>
    "tpu.trace_start"() <{level = 10 : i32, message = "ntd,nsd->nts"}> : () -> ()
    %cst_36 = arith.constant dense<0.000000e+00> : vector<2x8x10xf32>
    %93 = tpu.matmul %88, %90, %cst_36 {dimension_numbers = #tpu.dot_dimension_numbers<[2], [2], [1], [1], [0, 0, 0, 1, 1, 1], [0], [0]>} : vector<2x8x8xbf16>, vector<2x10x8xbf16>, vector<2x8x10xf32> -> vector<2x8x10xf32>
    "tpu.trace_stop"() : () -> ()
    %cst_37 = arith.constant dense<0xFF800000> : vector<2x8xf32>
    %94 = vector.multi_reduction <maximumf>, %93, %cst_37 [2] : vector<2x8x10xf32> to vector<2x8xf32>
    %95 = vector.shape_cast %94 : vector<2x8xf32> to vector<2x8x1xf32>
    %96 = vector.broadcast %95 : vector<2x8x1xf32> to vector<2x8x10xf32>
    %97 = arith.subf %93, %96 : vector<2x8x10xf32>
    %98 = math.exp %97 : vector<2x8x10xf32>
    %cst_38 = arith.constant dense<0.000000e+00> : vector<2x8xf32>
    %99 = vector.multi_reduction <add>, %98, %cst_38 [2] : vector<2x8x10xf32> to vector<2x8xf32>
    %100 = vector.shape_cast %99 : vector<2x8xf32> to vector<2x8x1xf32>
    %101 = tpu.reciprocal %100 {approx = true} : vector<2x8x1xf32> -> vector<2x8x1xf32>
    %102 = vector.broadcast %101 : vector<2x8x1xf32> to vector<2x8x10xf32>
    %103 = arith.mulf %98, %102 : vector<2x8x10xf32>
    %c3 = arith.constant 3 : index
    %c0_39 = arith.constant 0 : index
    %c0_40 = arith.constant 0 : index
    %c0_41 = arith.constant 0 : index
    %104 = vector.load %arg11[%c3, %c0_39, %c0_40, %c0_41] : memref<4x2x8x10xf32, #tpu.memory_space<vmem>>, vector<1x2x8x10xf32>
    %105 = vector.shape_cast %104 : vector<1x2x8x10xf32> to vector<2x8x10xf32>
    %106 = vector.shape_cast %103 : vector<2x8x10xf32> to vector<1x2x8x10xf32>
    tpu.vector_store %arg11[%c3, %c0_39, %c0_40, %c0_41], %106 {strides = array<i32>} : memref<4x2x8x10xf32, #tpu.memory_space<vmem>>, vector<1x2x8x10xf32>,
    %107 = arith.truncf %103 : vector<2x8x10xf32> to vector<2x8x10xbf16>
    "tpu.trace_start"() <{level = 10 : i32, message = "nts,nsd->ntd"}> : () -> ()
    %cst_42 = arith.constant dense<0.000000e+00> : vector<2x8x8xf32>
    %108 = tpu.matmul %107, %92, %cst_42 {dimension_numbers = #tpu.dot_dimension_numbers<[2], [1], [1], [2], [0, 0, 0, 1, 1, 2], [0], [0]>} : vector<2x8x10xbf16>, vector<2x10x8xbf16>, vector<2x8x8xf32> -> vector<2x8x8xf32>
    "tpu.trace_stop"() : () -> ()
    %109 = tpu.concatenate %42, %64, %86, %108 in 2 : vector<2x8x8xf32>, vector<2x8x8xf32>, vector<2x8x8xf32>, vector<2x8x8xf32> -> vector<2x8x32xf32>
    %110 = vector.shape_cast %109 : vector<2x8x32xf32> to vector<16x32xf32>
    %111 = arith.truncf %110 : vector<16x32xf32> to vector<16x32xbf16>
    %c0_43 = arith.constant 0 : index
    %c0_44 = arith.constant 0 : index
    %112 = vector.load %arg6[%c0_43, %c0_44] : memref<32x32xbf16, #tpu.memory_space<vmem>>, vector<32x32xbf16>
    %cst_45 = arith.constant dense<0.000000e+00> : vector<16x32xf32>
    %113 = tpu.matmul %111, %112, %cst_45 {dimension_numbers = #tpu.dot_dimension_numbers<[1], [0], [0], [1], [0, 0, 1, 1], [], []>} : vector<16x32xbf16>, vector<32x32xbf16>, vector<16x32xf32> -> vector<16x32xf32>
    %c0_46 = arith.constant 0 : index
    %c0_47 = arith.constant 0 : index
    %114 = vector.load %arg7[%c0_46, %c0_47] : memref<1x32xf32, #tpu.memory_space<vmem>>, vector<1x32xf32>
    %115 = vector.broadcast %114 : vector<1x32xf32> to vector<16x32xf32>
    %116 = arith.addf %113, %115 : vector<16x32xf32>
    %117 = arith.addf %1, %116 : vector<16x32xf32>
    %c0_48 = arith.constant 0 : index
    %c0_49 = arith.constant 0 : index
    %118 = vector.load %arg8[%c0_48, %c0_49] : memref<1x32xf32, #tpu.memory_space<vmem>>, vector<1x32xf32>
    %c0_50 = arith.constant 0 : index
    %c0_51 = arith.constant 0 : index
    %119 = vector.load %arg9[%c0_50, %c0_51] : memref<1x32xf32, #tpu.memory_space<vmem>>, vector<1x32xf32>
    %cst_52 = arith.constant dense<0.000000e+00> : vector<16xf32>
    %120 = vector.multi_reduction <add>, %117, %cst_52 [1] : vector<16x32xf32> to vector<16xf32>
    %121 = vector.shape_cast %120 : vector<16xf32> to vector<16x1xf32>
    %cst_53 = arith.constant 3.200000e+01 : f32
    %122 = vector.broadcast %cst_53 : f32 to vector<16x1xf32>
    %123 = arith.divf %121, %122 : vector<16x1xf32>
    %124 = vector.broadcast %123 : vector<16x1xf32> to vector<16x32xf32>
    %125 = arith.subf %117, %124 : vector<16x32xf32>
    %126 = arith.mulf %125, %125 : vector<16x32xf32>
    %cst_54 = arith.constant dense<0.000000e+00> : vector<16xf32>
    %127 = vector.multi_reduction <add>, %126, %cst_54 [1] : vector<16x32xf32> to vector<16xf32>
    %128 = vector.shape_cast %127 : vector<16xf32> to vector<16x1xf32>
    %cst_55 = arith.constant 3.200000e+01 : f32
    %129 = vector.broadcast %cst_55 : f32 to vector<16x1xf32>
    %130 = arith.divf %128, %129 : vector<16x1xf32>
    %131 = vector.broadcast %123 : vector<16x1xf32> to vector<16x32xf32>
    %132 = arith.subf %117, %131 : vector<16x32xf32>
    %cst_56 = arith.constant 9.99999974E-6 : f32
    %133 = vector.broadcast %cst_56 : f32 to vector<16x1xf32>
    %134 = arith.addf %130, %133 : vector<16x1xf32>
    %135 = math.rsqrt %134 : vector<16x1xf32>
    %136 = vector.broadcast %135 : vector<16x1xf32> to vector<16x32xf32>
    %137 = arith.mulf %132, %136 : vector<16x32xf32>
    %138 = vector.broadcast %118 : vector<1x32xf32> to vector<16x32xf32>
    %139 = arith.mulf %137, %138 : vector<16x32xf32>
    %140 = vector.broadcast %119 : vector<1x32xf32> to vector<16x32xf32>
    %141 = arith.addf %139, %140 : vector<16x32xf32>
    %142 = vector.shape_cast %141 : vector<16x32xf32> to vector<2x8x32xf32>
    %c0_57 = arith.constant 0 : index
    %c0_58 = arith.constant 0 : index
    %c0_59 = arith.constant 0 : index
    %143 = vector.load %arg10[%c0_57, %c0_58, %c0_59] : memref<2x8x32xf32, #tpu.memory_space<vmem>>, vector<2x8x32xf32>
    tpu.vector_store %arg10[%c0_57, %c0_58, %c0_59], %142 {strides = array<i32>} : memref<2x8x32xf32, #tpu.memory_space<vmem>>, vector<2x8x32xf32>,
    return
  }
}

module attributes {stable_mosaic.version = 11 : i64} {
  func.func @_ff_block_kernel(%arg0: memref<2x8x32xf32, #tpu.memory_space<vmem>>, %arg1: memref<32x64xbf16, #tpu.memory_space<vmem>>, %arg2: memref<1x64xf32, #tpu.memory_space<vmem>>, %arg3: memref<64x32xbf16, #tpu.memory_space<vmem>>, %arg4: memref<1x32xf32, #tpu.memory_space<vmem>>, %arg5: memref<1x32xf32, #tpu.memory_space<vmem>>, %arg6: memref<1x32xf32, #tpu.memory_space<vmem>>, %arg7: memref<2x8x32xf32, #tpu.memory_space<vmem>>) attributes {dimension_semantics = [], scalar_prefetch = 0 : i64, scratch_operands = 0 : i64, tpu.core_type = #tpu.core_type<tc>} {
    %c0 = arith.constant 0 : index
    %c0_0 = arith.constant 0 : index
    %c0_1 = arith.constant 0 : index
    %0 = vector.load %arg0[%c0, %c0_0, %c0_1] : memref<2x8x32xf32, #tpu.memory_space<vmem>>, vector<2x8x32xf32>
    %1 = vector.shape_cast %0 : vector<2x8x32xf32> to vector<16x32xf32>
    %2 = arith.truncf %1 : vector<16x32xf32> to vector<16x32xbf16>
    %c0_2 = arith.constant 0 : index
    %c0_3 = arith.constant 0 : index
    %3 = vector.load %arg1[%c0_2, %c0_3] : memref<32x64xbf16, #tpu.memory_space<vmem>>, vector<32x64xbf16>
    %cst = arith.constant dense<0.000000e+00> : vector<16x64xf32>
    %4 = tpu.matmul %2, %3, %cst {dimension_numbers = #tpu.dot_dimension_numbers<[1], [0], [0], [1], [0, 0, 1, 1], [], []>} : vector<16x32xbf16>, vector<32x64xbf16>, vector<16x64xf32> -> vector<16x64xf32>
    %c0_4 = arith.constant 0 : index
    %c0_5 = arith.constant 0 : index
    %5 = vector.load %arg2[%c0_4, %c0_5] : memref<1x64xf32, #tpu.memory_space<vmem>>, vector<1x64xf32>
    %6 = vector.broadcast %5 : vector<1x64xf32> to vector<16x64xf32>
    %7 = arith.addf %4, %6 : vector<16x64xf32>
    %cst_6 = arith.constant 0.000000e+00 : f32
    %8 = vector.broadcast %cst_6 : f32 to vector<16x64xf32>
    %9 = arith.maximumf %7, %8 : vector<16x64xf32>
    %10 = arith.truncf %9 : vector<16x64xf32> to vector<16x64xbf16>
    %c0_7 = arith.constant 0 : index
    %c0_8 = arith.constant 0 : index
    %11 = vector.load %arg3[%c0_7, %c0_8] : memref<64x32xbf16, #tpu.memory_space<vmem>>, vector<64x32xbf16>
    %cst_9 = arith.constant dense<0.000000e+00> : vector<16x32xf32>
    %12 = tpu.matmul %10, %11, %cst_9 {dimension_numbers = #tpu.dot_dimension_numbers<[1], [0], [0], [1], [0, 0, 1, 1], [], []>} : vector<16x64xbf16>, vector<64x32xbf16>, vector<16x32xf32> -> vector<16x32xf32>
    %c0_10 = arith.constant 0 : index
    %c0_11 = arith.constant 0 : index
    %13 = vector.load %arg4[%c0_10, %c0_11] : memref<1x32xf32, #tpu.memory_space<vmem>>, vector<1x32xf32>
    %14 = vector.broadcast %13 : vector<1x32xf32> to vector<16x32xf32>
    %15 = arith.addf %12, %14 : vector<16x32xf32>
    %16 = arith.addf %1, %15 : vector<16x32xf32>
    %c0_12 = arith.constant 0 : index
    %c0_13 = arith.constant 0 : index
    %17 = vector.load %arg5[%c0_12, %c0_13] : memref<1x32xf32, #tpu.memory_space<vmem>>, vector<1x32xf32>
    %c0_14 = arith.constant 0 : index
    %c0_15 = arith.constant 0 : index
    %18 = vector.load %arg6[%c0_14, %c0_15] : memref<1x32xf32, #tpu.memory_space<vmem>>, vector<1x32xf32>
    %cst_16 = arith.constant dense<0.000000e+00> : vector<16xf32>
    %19 = vector.multi_reduction <add>, %16, %cst_16 [1] : vector<16x32xf32> to vector<16xf32>
    %20 = vector.shape_cast %19 : vector<16xf32> to vector<16x1xf32>
    %cst_17 = arith.constant 3.200000e+01 : f32
    %21 = vector.broadcast %cst_17 : f32 to vector<16x1xf32>
    %22 = arith.divf %20, %21 : vector<16x1xf32>
    %23 = vector.broadcast %22 : vector<16x1xf32> to vector<16x32xf32>
    %24 = arith.subf %16, %23 : vector<16x32xf32>
    %25 = arith.mulf %24, %24 : vector<16x32xf32>
    %cst_18 = arith.constant dense<0.000000e+00> : vector<16xf32>
    %26 = vector.multi_reduction <add>, %25, %cst_18 [1] : vector<16x32xf32> to vector<16xf32>
    %27 = vector.shape_cast %26 : vector<16xf32> to vector<16x1xf32>
    %cst_19 = arith.constant 3.200000e+01 : f32
    %28 = vector.broadcast %cst_19 : f32 to vector<16x1xf32>
    %29 = arith.divf %27, %28 : vector<16x1xf32>
    %30 = vector.broadcast %22 : vector<16x1xf32> to vector<16x32xf32>
    %31 = arith.subf %16, %30 : vector<16x32xf32>
    %cst_20 = arith.constant 9.99999974E-6 : f32
    %32 = vector.broadcast %cst_20 : f32 to vector<16x1xf32>
    %33 = arith.addf %29, %32 : vector<16x1xf32>
    %34 = math.rsqrt %33 : vector<16x1xf32>
    %35 = vector.broadcast %34 : vector<16x1xf32> to vector<16x32xf32>
    %36 = arith.mulf %31, %35 : vector<16x32xf32>
    %37 = vector.broadcast %17 : vector<1x32xf32> to vector<16x32xf32>
    %38 = arith.mulf %36, %37 : vector<16x32xf32>
    %39 = vector.broadcast %18 : vector<1x32xf32> to vector<16x32xf32>
    %40 = arith.addf %38, %39 : vector<16x32xf32>
    %41 = vector.shape_cast %40 : vector<16x32xf32> to vector<2x8x32xf32>
    %c0_21 = arith.constant 0 : index
    %c0_22 = arith.constant 0 : index
    %c0_23 = arith.constant 0 : index
    %42 = vector.load %arg7[%c0_21, %c0_22, %c0_23] : memref<2x8x32xf32, #tpu.memory_space<vmem>>, vector<2x8x32xf32>
    tpu.vector_store %arg7[%c0_21, %c0_22, %c0_23], %41 {strides = array<i32>} : memref<2x8x32xf32, #tpu.memory_space<vmem>>, vector<2x8x32xf32>,
    return
  }
}

</mosaic_0001>

<llo_original>
// kernel: decoder_layer_forward.5
$region0: #{decoder_layer_forward.5}
  #allocation0 [shape = 'u32[]', space=smem, size = 0x4, offset = 0x4, fixed_abs, tag = 'smem constant byte address 0x4 - core index']
  #allocation1 [shape = 'u32[72,128]{1,0:T(1,128)}', space=vmem, size = 0x9000, scoped, tag = 'internal scratch']
  %s0 = inlined_call_operand.vmem [shape: f32[2,8,32], index: 0, kind: input, shape index: {}]
  %s1 = inlined_call_operand.vmem [shape: bf16[32,64], index: 1, kind: input, shape index: {}]
  %s2 = inlined_call_operand.vmem [shape: f32[1,64], index: 2, kind: input, shape index: {}]
  %s3 = inlined_call_operand.vmem [shape: bf16[64,32], index: 3, kind: input, shape index: {}]
  %s4 = inlined_call_operand.vmem [shape: f32[1,32], index: 4, kind: input, shape index: {}]
  %s5 = inlined_call_operand.vmem [shape: f32[1,32], index: 5, kind: input, shape index: {}]
  %s6 = inlined_call_operand.vmem [shape: f32[1,32], index: 6, kind: input, shape index: {}]
  %s7 = inlined_call_operand.vmem [shape: f32[2,8,32], index: 7, kind: output, shape index: {}]
  %s8 = sld [smem:[#allocation0]]
  $region38: #{decoder_layer_forward.5} parent=0
    _
  %s10 = ssub.s32 1, %s8
  %s11 = scalar_select 0, %s10, %s8
  // Predicated region
  $region2: #{decoder_layer_forward.5} parent=0 // pred_check
    _
  $region3: #{decoder_layer_forward.5} parent=0 // pred_check_branch
    %13 = sbr.rel (0) target = $region5
  $region4: #{decoder_layer_forward.5} parent=0 // pred_region
    _
  $region5: #{decoder_layer_forward.5} parent=0 // pred_fallthru
    _
  // Predicated region
  $region6: #{decoder_layer_forward.5} parent=0 // pred_check
    _
  $region7: #{decoder_layer_forward.5} parent=0 // pred_check_branch
    %15 = sbr.rel (0) target = $region9
  $region8: #{decoder_layer_forward.5} parent=0 // pred_region
    _
  $region9: #{decoder_layer_forward.5} parent=0 // pred_fallthru
    _
  // Predicated region
  $region10: #{decoder_layer_forward.5} parent=0 // pred_check
    _
  $region11: #{decoder_layer_forward.5} parent=0 // pred_check_branch
    %17 = sbr.rel (0) target = $region13
  $region12: #{decoder_layer_forward.5} parent=0 // pred_region
    _
  $region13: #{decoder_layer_forward.5} parent=0 // pred_fallthru
    _
  // Predicated region
  $region14: #{decoder_layer_forward.5} parent=0 // pred_check
    _
  $region15: #{decoder_layer_forward.5} parent=0 // pred_check_branch
    %19 = sbr.rel (0) target = $region17
  $region16: #{decoder_layer_forward.5} parent=0 // pred_region
    _
  $region17: #{decoder_layer_forward.5} parent=0 // pred_fallthru
    _
  // Predicated region
  $region18: #{decoder_layer_forward.5} parent=0 // pred_check
    _
  $region19: #{decoder_layer_forward.5} parent=0 // pred_check_branch
    %21 = sbr.rel (0) target = $region21
  $region20: #{decoder_layer_forward.5} parent=0 // pred_region
    _
  $region21: #{decoder_layer_forward.5} parent=0 // pred_fallthru
    _
  // Predicated region
  $region22: #{decoder_layer_forward.5} parent=0 // pred_check
    _
  $region23: #{decoder_layer_forward.5} parent=0 // pred_check_branch
    %23 = sbr.rel (0) target = $region25
  $region24: #{decoder_layer_forward.5} parent=0 // pred_region
    _
  $region25: #{decoder_layer_forward.5} parent=0 // pred_fallthru
    _
  // Predicated region
  $region26: #{decoder_layer_forward.5} parent=0 // pred_check
    _
  $region27: #{decoder_layer_forward.5} parent=0 // pred_check_branch
    %25 = sbr.rel (0) target = $region29
  $region28: #{decoder_layer_forward.5} parent=0 // pred_region
    _
  $region29: #{decoder_layer_forward.5} parent=0 // pred_fallthru
    _
  %v27 = vld [vmem:[%s0] sm:$0xff]
  %v28 = vld [vmem:[%s0 + $0x8] sm:$0xff]
  %v29 = vpack.c.bf16 %v28, %v27
  %v30 = vld [vmem:[%s1] sm:$0xf]
  %v31 = vld [vmem:[%s1 + $0x4] sm:$0xf]
  %v32 = vld [vmem:[%s1 + $0x8] sm:$0xf]
  %v33 = vld [vmem:[%s1 + $0xc] sm:$0xf]
  %v34 = vld [vmem:[%s2] sm:$0x1]
  %v36 = vperm.slane %v34, 0
  %v42 = vunpack.c.l.b16 %v30
  %v43 = vunpack.c.l.b16 %v31
  %v44 = vunpack.c.l.b16 %v32
  %v45 = vunpack.c.l.b16 %v33
  %v46 = vpack.c.b16 %v43, %v42
  %v47 = vpack.c.b16 %v45, %v44
  %vm50 = vcmask 261120
  %v52 = vsel %vm50, %v29, 0
  %54 = vmatpush.bf16.msra.mxu0 0
  %55 = vmatpush.bf16.msra.mxu0 0
  %56 = vmatpush.bf16.msra.mxu0 0
  %57 = vmatpush.bf16.msra.mxu0 0
  %58 = vmatpush.bf16.msra.mxu0 0
  %59 = vmatpush.bf16.msra.mxu0 0
  %60 = vmatpush.bf16.msra.mxu0 %v47
  %61 = vmatpush.bf16.msra.mxu0 %v46
  %62 = vmatmul.bf16.gmra.mxu0 %v52
  %v63 = vpop.f32.mrf.mxu0
  %v64 = vadd.f32 %v36, %v63
  %v65 = vpop.f32.mrf.mxu0
  %v66 = vadd.f32 %v36, %v65
  %67 = vdwg.mxu0
  %v68 = vmax.f32 %v64, 0.0
  %v69 = vmax.f32 %v66, 0.0
  %v70 = vpack.c.bf16 %v69, %v68
  %v71 = vld [vmem:[%s3] sm:$0xf]
  %v72 = vld [vmem:[%s3 + $0x4] sm:$0xf]
  %v73 = vld [vmem:[%s3 + $0x8] sm:$0xf]
  %v74 = vld [vmem:[%s3 + $0xc] sm:$0xf]
  %v75 = vld [vmem:[%s3 + $0x10] sm:$0xf]
  %v76 = vld [vmem:[%s3 + $0x14] sm:$0xf]
  %v77 = vld [vmem:[%s3 + $0x18] sm:$0xf]
  %v78 = vld [vmem:[%s3 + $0x1c] sm:$0xf]
  %v79 = vld [vmem:[%s4] sm:$0x1]
  %v81 = vperm.slane %v79, 0
  %v91 = vunpack.c.l.b16 %v71
  %v92 = vunpack.c.l.b16 %v72
  %v93 = vunpack.c.l.b16 %v73
  %v94 = vunpack.c.l.b16 %v74
  %v95 = vunpack.c.l.b16 %v75
  %v96 = vunpack.c.l.b16 %v76
  %v97 = vunpack.c.l.b16 %v77
  %v98 = vunpack.c.l.b16 %v78
  %v99 = vpack.c.b16 %v92, %v91
  %v100 = vpack.c.b16 %v94, %v93
  %v101 = vpack.c.b16 %v96, %v95
  %v102 = vpack.c.b16 %v98, %v97
  %vm107 = vcmask 523264
  %v109 = vsel %vm107, %v70, 0
  %111 = vmatpush.bf16.msra.mxu0 0
  %112 = vmatpush.bf16.msra.mxu0 0
  %113 = vmatpush.bf16.msra.mxu0 0
  %114 = vmatpush.bf16.msra.mxu0 0
  %115 = vmatpush.bf16.msra.mxu0 %v102
  %116 = vmatpush.bf16.msra.mxu0 %v101
  %117 = vmatpush.bf16.msra.mxu0 %v100
  %118 = vmatpush.bf16.msra.mxu0 %v99
  %119 = vmatmul.bf16.gmra.mxu0 %v109
  %v120 = vpop.f32.mrf.mxu0
  %v121 = vadd.f32 %v81, %v120
  %v122 = vpop.f32.mrf.mxu0
  %v123 = vadd.f32 %v81, %v122
  %124 = vdwg.mxu0
  %v125 = vadd.f32 %v27, %v121
  %v126 = vadd.f32 %v28, %v123
  %v127 = vld [vmem:[%s5] sm:$0x1]
  %v128 = vld [vmem:[%s6] sm:$0x1]
  %v129 = vsel %vm50, %v125, 0.0
  %130 = vadd.xlane.f32.xlu0 %v129
  %v131 = vpop.xlane.xlu0 %130
  %v132 = vsel %vm50, %v126, 0.0
  %133 = vadd.xlane.f32.xlu0 %v132
  %v134 = vpop.xlane.xlu0 %133
  %v135 = vrcp.pop 32.0
  %v136 = vmul.f32 32.0, %v135
  %v137 = vsub.f32 1.0, %v136
  %v138 = vmul.f32 %v135, %v137
  %v139 = vadd.f32 %v135, %v138
  %vm140 = vweird.f32 %v135
  %v141 = vsel %vm140, %v135, %v139
  %v142 = vmul.f32 %v131, %v141
  %v143 = vmul.f32 %v134, %v141
  %v144 = vsub.f32 %v125, %v142
  %v145 = vsub.f32 %v126, %v143
  %v146 = vmul.f32 %v144, %v144
  %v147 = vmul.f32 %v145, %v145
  %v148 = vsel %vm50, %v146, 0.0
  %149 = vadd.xlane.f32.xlu0 %v148
  %v150 = vpop.xlane.xlu0 %149
  %v151 = vsel %vm50, %v147, 0.0
  %152 = vadd.xlane.f32.xlu0 %v151
  %v153 = vpop.xlane.xlu0 %152
  %v154 = vmul.f32 %v150, %v141
  %v155 = vmul.f32 %v153, %v141
  %v156 = vadd.f32 %v154, 1e-05
  %v157 = vadd.f32 %v155, 1e-05
  %v158 = vrsqrt.pop %v156
  %v159 = vmul.f32 %v158, %v156
  %v160 = vmul.f32 %v159, %v158
  %v161 = vmul.f32 0.5, %v160
  %v162 = vsub.f32 1.5, %v161
  %v163 = vmul.f32 %v158, %v162
  %vm164 = vweird.f32 %v156
  %vm165 = vweird.f32 %v158
  %vm166 = vmor %vm164, %vm165
  %v167 = vsel %vm166, %v158, %v163
  %v168 = vrsqrt.pop %v157
  %v169 = vmul.f32 %v168, %v157
  %v170 = vmul.f32 %v169, %v168
  %v171 = vmul.f32 0.5, %v170
  %v172 = vsub.f32 1.5, %v171
  %v173 = vmul.f32 %v168, %v172
  %vm174 = vweird.f32 %v157
  %vm175 = vweird.f32 %v168
  %vm176 = vmor %vm174, %vm175
  %v177 = vsel %vm176, %v168, %v173
  %v178 = vmul.f32 %v144, %v167
  %v179 = vmul.f32 %v145, %v177
  %v181 = vperm.slane %v127, 0
  %v183 = vmul.f32 %v178, %v181
  %v184 = vmul.f32 %v179, %v181
  %v186 = vperm.slane %v128, 0
  %v188 = vadd.f32 %v183, %v186
  %v189 = vadd.f32 %v184, %v186
  %190 = vst.msk [vmem:[%s7] sm:$0xff] %vm50, %v188
  %191 = vst.msk [vmem:[%s7 + $0x8] sm:$0xff] %vm50, %v189
  // Predicated region
  $region30: #{decoder_layer_forward.5} parent=0 // pred_check
    _
  $region31: #{decoder_layer_forward.5} parent=0 // pred_check_branch
    %193 = sbr.rel (0) target = $region33
  $region32: #{decoder_layer_forward.5} parent=0 // pred_region
    _
  $region33: #{decoder_layer_forward.5} parent=0 // pred_fallthru
    _
  // Predicated region
  $region34: #{decoder_layer_forward.5} parent=0 // pred_check
    _
  $region35: #{decoder_layer_forward.5} parent=0 // pred_check_branch
    %195 = sbr.rel (0) target = $region37
  $region36: #{decoder_layer_forward.5} parent=0 // pred_region
    _
  $region37: #{decoder_layer_forward.5} parent=0 // pred_fallthru
    _

// kernel: decoder_layer_forward.3
$region0: #{decoder_layer_forward.3}
  #allocation0 [shape = 'u32[]', space=smem, size = 0x4, offset = 0x4, fixed_abs, tag = 'smem constant byte address 0x4 - core index']
  #allocation1 [shape = 'u32[72,128]{1,0:T(1,128)}', space=vmem, size = 0x9000, scoped, tag = 'internal scratch']
  %s0 = inlined_call_operand.vmem [shape: f32[2,8,32], index: 0, kind: input, shape index: {}]
  %s1 = inlined_call_operand.vmem [shape: f32[8,8], index: 1, kind: input, shape index: {}]
  %s2 = inlined_call_operand.vmem [shape: f32[2,8], index: 2, kind: input, shape index: {}]
  %s3 = inlined_call_operand.vmem [shape: bf16[32,96], index: 3, kind: input, shape index: {}]
  %s4 = inlined_call_operand.vmem [shape: f32[1,96], index: 4, kind: input, shape index: {}]
  %s5 = inlined_call_operand.hbm [shape: bf16[32,32], index: 5, kind: input, shape index: {}]
  %s6 = inlined_call_operand.vmem [shape: f32[1,32], index: 6, kind: input, shape index: {}]
  %s7 = inlined_call_operand.vmem [shape: f32[1,32], index: 7, kind: input, shape index: {}]
  %s8 = inlined_call_operand.vmem [shape: f32[1,32], index: 8, kind: input, shape index: {}]
  %s9 = inlined_call_operand.vmem [shape: f32[2,8,32], index: 9, kind: output, shape index: {}]
  %s10 = sld [smem:[#allocation0]]
  $region50: #{decoder_layer_forward.3} parent=0
    _
  %s12 = ssub.s32 1, %s10
  %s13 = scalar_select 0, %s12, %s10
  $region1: #{decoder_layer_forward.3} parent=0
    #allocation2 [shape = 'u8[8192]{0}', space=vmem, size = 0x2000, scoped, tag = 'input window, operand 5, single buffered']
    #allocation3 [shape = 's32[1]{0}', space=sflag, size = 0x4, scoped, tag = 'scoped memory for decoder_layer_forward.3']
    %14 = vsyncpa [#allocation3], 0
    // Predicated region
    $region2: #{decoder_layer_forward.3} parent=1 // pred_check
      _
    $region3: #{decoder_layer_forward.3} parent=1 // pred_check_branch
      %16 = sbr.rel (0) target = $region5
    $region4: #{decoder_layer_forward.3} parent=1 // pred_region
      _
    $region5: #{decoder_layer_forward.3} parent=1 // pred_fallthru
      _
    // Predicated region
    $region6: #{decoder_layer_forward.3} parent=1 // pred_check
      _
    $region7: #{decoder_layer_forward.3} parent=1 // pred_check_branch
      %18 = sbr.rel (0) target = $region9
    $region8: #{decoder_layer_forward.3} parent=1 // pred_region
      _
    $region9: #{decoder_layer_forward.3} parent=1 // pred_fallthru
      _
    // Predicated region
    $region10: #{decoder_layer_forward.3} parent=1 // pred_check
      _
    $region11: #{decoder_layer_forward.3} parent=1 // pred_check_branch
      %20 = sbr.rel (0) target = $region13
    $region12: #{decoder_layer_forward.3} parent=1 // pred_region
      _
    $region13: #{decoder_layer_forward.3} parent=1 // pred_fallthru
      _
    // Predicated region
    $region14: #{decoder_layer_forward.3} parent=1 // pred_check
      _
    $region15: #{decoder_layer_forward.3} parent=1 // pred_check_branch
      %22 = sbr.rel (0) target = $region17
    $region16: #{decoder_layer_forward.3} parent=1 // pred_region
      _
    $region17: #{decoder_layer_forward.3} parent=1 // pred_fallthru
      _
    // Predicated region
    $region18: #{decoder_layer_forward.3} parent=1 // pred_check
      _
    $region19: #{decoder_layer_forward.3} parent=1 // pred_check_branch
      %24 = sbr.rel (0) target = $region21
    $region20: #{decoder_layer_forward.3} parent=1 // pred_region
      _
    $region21: #{decoder_layer_forward.3} parent=1 // pred_fallthru
      _
    // Predicated region
    $region22: #{decoder_layer_forward.3} parent=1 // pred_check
      _
    $region23: #{decoder_layer_forward.3} parent=1 // pred_check_branch
      %26 = sbr.rel (0) target = $region25
    $region24: #{decoder_layer_forward.3} parent=1 // pred_region
      %28 = vsyncadd [#allocation3], 0
      %s29 = sshll.u32 %s5, 4
      %s30 = int_to_ptr.hbm [resolvable:$true] %s29
      %s31 = sshll.u32 [#allocation2], 4
      %s32 = int_to_ptr.vmem [resolvable:$true] %s31
      %37 = dma.hbm_to_vmem [thread:$0]  %s30, 256, %s32, [#allocation3], 64, 64, 4
    $region25: #{decoder_layer_forward.3} parent=1 // pred_fallthru
      _
    // Predicated region
    $region26: #{decoder_layer_forward.3} parent=1 // pred_check
      _
    $region27: #{decoder_layer_forward.3} parent=1 // pred_check_branch
      %39 = sbr.rel (0) target = $region29
    $region28: #{decoder_layer_forward.3} parent=1 // pred_region
      _
    $region29: #{decoder_layer_forward.3} parent=1 // pred_fallthru
      _
    // Predicated region
    $region30: #{decoder_layer_forward.3} parent=1 // pred_check
      _
    $region31: #{decoder_layer_forward.3} parent=1 // pred_check_branch
      %41 = sbr.rel (0) target = $region33
    $region32: #{decoder_layer_forward.3} parent=1 // pred_region
      _
    $region33: #{decoder_layer_forward.3} parent=1 // pred_fallthru
      _
    // Predicated region
    $region34: #{decoder_layer_forward.3} parent=1 // pred_check
      _
    $region35: #{decoder_layer_forward.3} parent=1 // pred_check_branch
      %43 = sbr.rel (0) target = $region37
    $region36: #{decoder_layer_forward.3} parent=1 // pred_region
      _
    $region37: #{decoder_layer_forward.3} parent=1 // pred_fallthru
      _
    // Predicated region
    $region38: #{decoder_layer_forward.3} parent=1 // pred_check
      _
    $region39: #{decoder_layer_forward.3} parent=1 // pred_check_branch
      %45 = sbr.rel (0) target = $region41
    $region40: #{decoder_layer_forward.3} parent=1 // pred_region
      %47 = dma.done [#allocation3], 256
    $region41: #{decoder_layer_forward.3} parent=1 // pred_fallthru
      _
    %v49 = vld [vmem:[%s0] sm:$0xff]
    %v50 = vld [vmem:[%s0 + $0x8] sm:$0xff]
    %v51 = vpack.c.bf16 %v50, %v49
    %v52 = vld [vmem:[%s3] sm:$0xf]
    %v53 = vld [vmem:[%s3 + $0x4] sm:$0xf]
    %v54 = vld [vmem:[%s3 + $0x8] sm:$0xf]
    %v55 = vld [vmem:[%s3 + $0xc] sm:$0xf]
    %v56 = vld [vmem:[%s4] sm:$0x1]
    %v58 = vperm.slane %v56, 0
    %v64 = vunpack.c.l.b16 %v52
    %v65 = vunpack.c.l.b16 %v53
    %v66 = vunpack.c.l.b16 %v54
    %v67 = vunpack.c.l.b16 %v55
    %v68 = vpack.c.b16 %v65, %v64
    %v69 = vpack.c.b16 %v67, %v66
    %vm72 = vcmask 261120
    %v74 = vsel %vm72, %v51, 0
    %76 = vmatpush.bf16.msra.mxu0 0
    %77 = vmatpush.bf16.msra.mxu0 0
    %78 = vmatpush.bf16.msra.mxu0 0
    %79 = vmatpush.bf16.msra.mxu0 0
    %80 = vmatpush.bf16.msra.mxu0 0
    %81 = vmatpush.bf16.msra.mxu0 0
    %82 = vmatpush.bf16.msra.mxu0 %v69
    %83 = vmatpush.bf16.msra.mxu0 %v68
    %84 = vmatmul.bf16.gmra.mxu0 %v74
    %v85 = vpop.f32.mrf.mxu0
    %v86 = vadd.f32 %v58, %v85
    %v87 = vpop.f32.mrf.mxu0
    %v88 = vadd.f32 %v58, %v87
    %89 = vdwg.mxu0
    %v90 = vld [vmem:[%s1] sm:$0xff]
    %v91 = vld [vmem:[%s2] sm:$0x3]
    %v93 = vrot.slane %v91, 1
    %v94 = vperm.slane %v91, 0
    %v95 = vperm.slane %v93, 0
    %v98 = vadd.f32 %v90, %v94
    %v99 = vadd.f32 %v90, %v95
    %v100 = vpack.c.bf16 %v86, %v86
    %v101 = vpack.c.bf16 %v88, %v88
    %v103 = vunpack.c.l.b16 %v100
    %v104 = vpack.c.b16 %v103, %v103
    %105 = vrot.lane.b32.xlu0 %v104, 96
    %v106 = vpop.permute.xlu0 %105
    %vm107 = vcmask 64512
    %v109 = vsel %vm107, %v100, 0
    %v112 = vsel %vm107, %v106, 0
    %114 = vmatpush.bf16.xpose.msra.mxu0 0
    %115 = vmatpush.bf16.xpose.msra.mxu0 0
    %116 = vmatpush.bf16.xpose.msra.mxu0 0
    %117 = vmatpush.bf16.xpose.msra.mxu0 0
    %118 = vmatpush.bf16.xpose.msra.mxu0 0
    %119 = vmatpush.bf16.xpose.msra.mxu0 0
    %120 = vmatpush.bf16.xpose.msra.mxu0 0
    %121 = vmatpush.bf16.xpose.msra.mxu0 %v112
    %122 = vmatmul.bf16.gmra.mxu0 %v109
    %v123 = vpop.f32.mrf.mxu0
    %v124 = vadd.f32 %v98, %v123
    %v125 = vpop.f32.mrf.mxu0
    %126 = vdwg.mxu0
    %v128 = vunpack.c.l.b16 %v101
    %v129 = vpack.c.b16 %v128, %v128
    %130 = vrot.lane.b32.xlu0 %v129, 96
    %v131 = vpop.permute.xlu0 %130
    %v133 = vsel %vm107, %v101, 0
    %v136 = vsel %vm107, %v131, 0
    %138 = vmatpush.bf16.xpose.msra.mxu0 0
    %139 = vmatpush.bf16.xpose.msra.mxu0 0
    %140 = vmatpush.bf16.xpose.msra.mxu0 0
    %141 = vmatpush.bf16.xpose.msra.mxu0 0
    %142 = vmatpush.bf16.xpose.msra.mxu0 0
    %143 = vmatpush.bf16.xpose.msra.mxu0 0
    %144 = vmatpush.bf16.xpose.msra.mxu0 0
    %145 = vmatpush.bf16.xpose.msra.mxu0 %v136
    %146 = vmatmul.bf16.gmra.mxu0 %v133
    %v147 = vpop.f32.mrf.mxu0
    %v148 = vadd.f32 %v99, %v147
    %v149 = vpop.f32.mrf.mxu0
    %150 = vdwg.mxu0
    %v151 = vsel %vm107, %v124, -inf
    %152 = vmax.xlane.f32.xlu0 %v151
    %v153 = vpop.xlane.xlu0 %152
    %v154 = vsel %vm107, %v148, -inf
    %155 = vmax.xlane.f32.xlu0 %v154
    %v156 = vpop.xlane.xlu0 %155
    %v157 = vsub.f32 %v124, %v153
    %v158 = vsub.f32 %v148, %v156
    %v159 = vmul.f32 %v157, 1.442695
    %v160 = vpow.pop %v159
    %v161 = vmul.f32 %v158, 1.442695
    %v162 = vpow.pop %v161
    %v163 = vsel %vm107, %v160, 0.0
    %164 = vadd.xlane.f32.xlu0 %v163
    %v165 = vpop.xlane.xlu0 %164
    %v166 = vsel %vm107, %v162, 0.0
    %167 = vadd.xlane.f32.xlu0 %v166
    %v168 = vpop.xlane.xlu0 %167
    %v169 = vrcp.pop %v165
    %v170 = vrcp.pop %v168
    %v171 = vmul.f32 %v160, %v169
    %v172 = vmul.f32 %v162, %v170
    %v173 = vpack.c.bf16 %v171, %v171
    %v174 = vpack.c.bf16 %v172, %v172
    %175 = vrot.lane.b32.xlu0 %v104, 64
    %v176 = vpop.permute.xlu0 %175
    %v178 = vsel %vm107, %v173, 0
    %vm180 = vcmask 1043456
    %v182 = vsel %vm180, %v176, 0
    %184 = vmatpush.bf16.msra.mxu0 0
    %185 = vmatpush.bf16.msra.mxu0 0
    %186 = vmatpush.bf16.msra.mxu0 0
    %187 = vmatpush.bf16.msra.mxu0 0
    %188 = vmatpush.bf16.msra.mxu0 0
    %189 = vmatpush.bf16.msra.mxu0 0
    %190 = vmatpush.bf16.msra.mxu0 0
    %191 = vmatpush.bf16.msra.mxu0 %v182
    %192 = vmatmul.bf16.gmra.mxu0 %v178
    %v193 = vpop.f32.mrf.mxu0
    %v194 = vadd.f32 0.0, %v193
    %v195 = vpop.f32.mrf.mxu0
    %196 = vdwg.mxu0
    %197 = vrot.lane.b32.xlu0 %v129, 64
    %v198 = vpop.permute.xlu0 %197
    %v200 = vsel %vm107, %v174, 0
    %v203 = vsel %vm180, %v198, 0
    %205 = vmatpush.bf16.msra.mxu0 0
    %206 = vmatpush.bf16.msra.mxu0 0
    %207 = vmatpush.bf16.msra.mxu0 0
    %208 = vmatpush.bf16.msra.mxu0 0
    %209 = vmatpush.bf16.msra.mxu0 0
    %210 = vmatpush.bf16.msra.mxu0 0
    %211 = vmatpush.bf16.msra.mxu0 0
    %212 = vmatpush.bf16.msra.mxu0 %v203
    %213 = vmatmul.bf16.gmra.mxu0 %v200
    %v214 = vpop.f32.mrf.mxu0
    %v215 = vadd.f32 0.0, %v214
    %v216 = vpop.f32.mrf.mxu0
    %217 = vdwg.mxu0
    %218 = vrot.lane.b32.xlu0 %v104, 120
    %v219 = vpop.permute.xlu0 %218
    %220 = vrot.lane.b32.xlu0 %v104, 88
    %v221 = vpop.permute.xlu0 %220
    %v223 = vsel %vm107, %v219, 0
    %v226 = vsel %vm107, %v221, 0
    %228 = vmatpush.bf16.xpose.msra.mxu0 0
    %229 = vmatpush.bf16.xpose.msra.mxu0 0
    %230 = vmatpush.bf16.xpose.msra.mxu0 0
    %231 = vmatpush.bf16.xpose.msra.mxu0 0
    %232 = vmatpush.bf16.xpose.msra.mxu0 0
    %233 = vmatpush.bf16.xpose.msra.mxu0 0
    %234 = vmatpush.bf16.xpose.msra.mxu0 0
    %235 = vmatpush.bf16.xpose.msra.mxu0 %v226
    %236 = vmatmul.bf16.gmra.mxu0 %v223
    %v237 = vpop.f32.mrf.mxu0
    %v238 = vadd.f32 %v98, %v237
    %v239 = vpop.f32.mrf.mxu0
    %240 = vdwg.mxu0
    %241 = vrot.lane.b32.xlu0 %v129, 120
    %v242 = vpop.permute.xlu0 %241
    %243 = vrot.lane.b32.xlu0 %v129, 88
    %v244 = vpop.permute.xlu0 %243
    %v246 = vsel %vm107, %v242, 0
    %v249 = vsel %vm107, %v244, 0
    %251 = vmatpush.bf16.xpose.msra.mxu0 0
    %252 = vmatpush.bf16.xpose.msra.mxu0 0
    %253 = vmatpush.bf16.xpose.msra.mxu0 0
    %254 = vmatpush.bf16.xpose.msra.mxu0 0
    %255 = vmatpush.bf16.xpose.msra.mxu0 0
    %256 = vmatpush.bf16.xpose.msra.mxu0 0
    %257 = vmatpush.bf16.xpose.msra.mxu0 0
    %258 = vmatpush.bf16.xpose.msra.mxu0 %v249
    %259 = vmatmul.bf16.gmra.mxu0 %v246
    %v260 = vpop.f32.mrf.mxu0
    %v261 = vadd.f32 %v99, %v260
    %v262 = vpop.f32.mrf.mxu0
    %263 = vdwg.mxu0
    %v264 = vsel %vm107, %v238, -inf
    %265 = vmax.xlane.f32.xlu0 %v264
    %v266 = vpop.xlane.xlu0 %265
    %v267 = vsel %vm107, %v261, -inf
    %268 = vmax.xlane.f32.xlu0 %v267
    %v269 = vpop.xlane.xlu0 %268
    %v270 = vsub.f32 %v238, %v266
    %v271 = vsub.f32 %v261, %v269
    %v272 = vmul.f32 %v270, 1.442695
    %v273 = vpow.pop %v272
    %v274 = vmul.f32 %v271, 1.442695
    %v275 = vpow.pop %v274
    %v276 = vsel %vm107, %v273, 0.0
    %277 = vadd.xlane.f32.xlu0 %v276
    %v278 = vpop.xlane.xlu0 %277
    %v279 = vsel %vm107, %v275, 0.0
    %280 = vadd.xlane.f32.xlu0 %v279
    %v281 = vpop.xlane.xlu0 %280
    %v282 = vrcp.pop %v278
    %v283 = vrcp.pop %v281
    %v284 = vmul.f32 %v273, %v282
    %v285 = vmul.f32 %v275, %v283
    %v286 = vpack.c.bf16 %v284, %v284
    %v287 = vpack.c.bf16 %v285, %v285
    %288 = vrot.lane.b32.xlu0 %v104, 56
    %v289 = vpop.permute.xlu0 %288
    %v291 = vsel %vm107, %v286, 0
    %v294 = vsel %vm180, %v289, 0
    %296 = vmatpush.bf16.msra.mxu0 0
    %297 = vmatpush.bf16.msra.mxu0 0
    %298 = vmatpush.bf16.msra.mxu0 0
    %299 = vmatpush.bf16.msra.mxu0 0
    %300 = vmatpush.bf16.msra.mxu0 0
    %301 = vmatpush.bf16.msra.mxu0 0
    %302 = vmatpush.bf16.msra.mxu0 0
    %303 = vmatpush.bf16.msra.mxu0 %v294
    %304 = vmatmul.bf16.gmra.mxu0 %v291
    %v305 = vpop.f32.mrf.mxu0
    %v306 = vadd.f32 0.0, %v305
    %v307 = vpop.f32.mrf.mxu0
    %308 = vdwg.mxu0
    %309 = vrot.lane.b32.xlu0 %v129, 56
    %v310 = vpop.permute.xlu0 %309
    %v312 = vsel %vm107, %v287, 0
    %v315 = vsel %vm180, %v310, 0
    %317 = vmatpush.bf16.msra.mxu0 0
    %318 = vmatpush.bf16.msra.mxu0 0
    %319 = vmatpush.bf16.msra.mxu0 0
    %320 = vmatpush.bf16.msra.mxu0 0
    %321 = vmatpush.bf16.msra.mxu0 0
    %322 = vmatpush.bf16.msra.mxu0 0
    %323 = vmatpush.bf16.msra.mxu0 0
    %324 = vmatpush.bf16.msra.mxu0 %v315
    %325 = vmatmul.bf16.gmra.mxu0 %v312
    %v326 = vpop.f32.mrf.mxu0
    %v327 = vadd.f32 0.0, %v326
    %v328 = vpop.f32.mrf.mxu0
    %329 = vdwg.mxu0
    %330 = vrot.lane.b32.xlu0 %v104, 112
    %v331 = vpop.permute.xlu0 %330
    %332 = vrot.lane.b32.xlu0 %v104, 80
    %v333 = vpop.permute.xlu0 %332
    %v335 = vsel %vm107, %v331, 0
    %v338 = vsel %vm107, %v333, 0
    %340 = vmatpush.bf16.xpose.msra.mxu0 0
    %341 = vmatpush.bf16.xpose.msra.mxu0 0
    %342 = vmatpush.bf16.xpose.msra.mxu0 0
    %343 = vmatpush.bf16.xpose.msra.mxu0 0
    %344 = vmatpush.bf16.xpose.msra.mxu0 0
    %345 = vmatpush.bf16.xpose.msra.mxu0 0
    %346 = vmatpush.bf16.xpose.msra.mxu0 0
    %347 = vmatpush.bf16.xpose.msra.mxu0 %v338
    %348 = vmatmul.bf16.gmra.mxu0 %v335
    %v349 = vpop.f32.mrf.mxu0
    %v350 = vadd.f32 %v98, %v349
    %v351 = vpop.f32.mrf.mxu0
    %352 = vdwg.mxu0
    %353 = vrot.lane.b32.xlu0 %v129, 112
    %v354 = vpop.permute.xlu0 %353
    %355 = vrot.lane.b32.xlu0 %v129, 80
    %v356 = vpop.permute.xlu0 %355
    %v358 = vsel %vm107, %v354, 0
    %v361 = vsel %vm107, %v356, 0
    %363 = vmatpush.bf16.xpose.msra.mxu0 0
    %364 = vmatpush.bf16.xpose.msra.mxu0 0
    %365 = vmatpush.bf16.xpose.msra.mxu0 0
    %366 = vmatpush.bf16.xpose.msra.mxu0 0
    %367 = vmatpush.bf16.xpose.msra.mxu0 0
    %368 = vmatpush.bf16.xpose.msra.mxu0 0
    %369 = vmatpush.bf16.xpose.msra.mxu0 0
    %370 = vmatpush.bf16.xpose.msra.mxu0 %v361
    %371 = vmatmul.bf16.gmra.mxu0 %v358
    %v372 = vpop.f32.mrf.mxu0
    %v373 = vadd.f32 %v99, %v372
    %v374 = vpop.f32.mrf.mxu0
    %375 = vdwg.mxu0
    %v376 = vsel %vm107, %v350, -inf
    %377 = vmax.xlane.f32.xlu0 %v376
    %v378 = vpop.xlane.xlu0 %377
    %v379 = vsel %vm107, %v373, -inf
    %380 = vmax.xlane.f32.xlu0 %v379
    %v381 = vpop.xlane.xlu0 %380
    %v382 = vsub.f32 %v350, %v378
    %v383 = vsub.f32 %v373, %v381
    %v384 = vmul.f32 %v382, 1.442695
    %v385 = vpow.pop %v384
    %v386 = vmul.f32 %v383, 1.442695
    %v387 = vpow.pop %v386
    %v388 = vsel %vm107, %v385, 0.0
    %389 = vadd.xlane.f32.xlu0 %v388
    %v390 = vpop.xlane.xlu0 %389
    %v391 = vsel %vm107, %v387, 0.0
    %392 = vadd.xlane.f32.xlu0 %v391
    %v393 = vpop.xlane.xlu0 %392
    %v394 = vrcp.pop %v390
    %v395 = vrcp.pop %v393
    %v396 = vmul.f32 %v385, %v394
    %v397 = vmul.f32 %v387, %v395
    %v398 = vpack.c.bf16 %v396, %v396
    %v399 = vpack.c.bf16 %v397, %v397
    %400 = vrot.lane.b32.xlu0 %v104, 48
    %v401 = vpop.permute.xlu0 %400
    %v403 = vsel %vm107, %v398, 0
    %v406 = vsel %vm180, %v401, 0
    %408 = vmatpush.bf16.msra.mxu0 0
    %409 = vmatpush.bf16.msra.mxu0 0
    %410 = vmatpush.bf16.msra.mxu0 0
    %411 = vmatpush.bf16.msra.mxu0 0
    %412 = vmatpush.bf16.msra.mxu0 0
    %413 = vmatpush.bf16.msra.mxu0 0
    %414 = vmatpush.bf16.msra.mxu0 0
    %415 = vmatpush.bf16.msra.mxu0 %v406
    %416 = vmatmul.bf16.gmra.mxu0 %v403
    %v417 = vpop.f32.mrf.mxu0
    %v418 = vadd.f32 0.0, %v417
    %v419 = vpop.f32.mrf.mxu0
    %420 = vdwg.mxu0
    %421 = vrot.lane.b32.xlu0 %v129, 48
    %v422 = vpop.permute.xlu0 %421
    %v424 = vsel %vm107, %v399, 0
    %v427 = vsel %vm180, %v422, 0
    %429 = vmatpush.bf16.msra.mxu0 0
    %430 = vmatpush.bf16.msra.mxu0 0
    %431 = vmatpush.bf16.msra.mxu0 0
    %432 = vmatpush.bf16.msra.mxu0 0
    %433 = vmatpush.bf16.msra.mxu0 0
    %434 = vmatpush.bf16.msra.mxu0 0
    %435 = vmatpush.bf16.msra.mxu0 0
    %436 = vmatpush.bf16.msra.mxu0 %v427
    %437 = vmatmul.bf16.gmra.mxu0 %v424
    %v438 = vpop.f32.mrf.mxu0
    %v439 = vadd.f32 0.0, %v438
    %v440 = vpop.f32.mrf.mxu0
    %441 = vdwg.mxu0
    %442 = vrot.lane.b32.xlu0 %v104, 104
    %v443 = vpop.permute.xlu0 %442
    %444 = vrot.lane.b32.xlu0 %v104, 72
    %v445 = vpop.permute.xlu0 %444
    %v447 = vsel %vm107, %v443, 0
    %v450 = vsel %vm107, %v445, 0
    %452 = vmatpush.bf16.xpose.msra.mxu0 0
    %453 = vmatpush.bf16.xpose.msra.mxu0 0
    %454 = vmatpush.bf16.xpose.msra.mxu0 0
    %455 = vmatpush.bf16.xpose.msra.mxu0 0
    %456 = vmatpush.bf16.xpose.msra.mxu0 0
    %457 = vmatpush.bf16.xpose.msra.mxu0 0
    %458 = vmatpush.bf16.xpose.msra.mxu0 0
    %459 = vmatpush.bf16.xpose.msra.mxu0 %v450
    %460 = vmatmul.bf16.gmra.mxu0 %v447
    %v461 = vpop.f32.mrf.mxu0
    %v462 = vadd.f32 %v98, %v461
    %v463 = vpop.f32.mrf.mxu0
    %464 = vdwg.mxu0
    %465 = vrot.lane.b32.xlu0 %v129, 104
    %v466 = vpop.permute.xlu0 %465
    %467 = vrot.lane.b32.xlu0 %v129, 72
    %v468 = vpop.permute.xlu0 %467
    %v470 = vsel %vm107, %v466, 0
    %v473 = vsel %vm107, %v468, 0
    %475 = vmatpush.bf16.xpose.msra.mxu0 0
    %476 = vmatpush.bf16.xpose.msra.mxu0 0
    %477 = vmatpush.bf16.xpose.msra.mxu0 0
    %478 = vmatpush.bf16.xpose.msra.mxu0 0
    %479 = vmatpush.bf16.xpose.msra.mxu0 0
    %480 = vmatpush.bf16.xpose.msra.mxu0 0
    %481 = vmatpush.bf16.xpose.msra.mxu0 0
    %482 = vmatpush.bf16.xpose.msra.mxu0 %v473
    %483 = vmatmul.bf16.gmra.mxu0 %v470
    %v484 = vpop.f32.mrf.mxu0
    %v485 = vadd.f32 %v99, %v484
    %v486 = vpop.f32.mrf.mxu0
    %487 = vdwg.mxu0
    %v488 = vsel %vm107, %v462, -inf
    %489 = vmax.xlane.f32.xlu0 %v488
    %v490 = vpop.xlane.xlu0 %489
    %v491 = vsel %vm107, %v485, -inf
    %492 = vmax.xlane.f32.xlu0 %v491
    %v493 = vpop.xlane.xlu0 %492
    %v494 = vsub.f32 %v462, %v490
    %v495 = vsub.f32 %v485, %v493
    %v496 = vmul.f32 %v494, 1.442695
    %v497 = vpow.pop %v496
    %v498 = vmul.f32 %v495, 1.442695
    %v499 = vpow.pop %v498
    %v500 = vsel %vm107, %v497, 0.0
    %501 = vadd.xlane.f32.xlu0 %v500
    %v502 = vpop.xlane.xlu0 %501
    %v503 = vsel %vm107, %v499, 0.0
    %504 = vadd.xlane.f32.xlu0 %v503
    %v505 = vpop.xlane.xlu0 %504
    %v506 = vrcp.pop %v502
    %v507 = vrcp.pop %v505
    %v508 = vmul.f32 %v497, %v506
    %v509 = vmul.f32 %v499, %v507
    %v510 = vpack.c.bf16 %v508, %v508
    %v511 = vpack.c.bf16 %v509, %v509
    %512 = vrot.lane.b32.xlu0 %v104, 40
    %v513 = vpop.permute.xlu0 %512
    %v515 = vsel %vm107, %v510, 0
    %v518 = vsel %vm180, %v513, 0
    %520 = vmatpush.bf16.msra.mxu0 0
    %521 = vmatpush.bf16.msra.mxu0 0
    %522 = vmatpush.bf16.msra.mxu0 0
    %523 = vmatpush.bf16.msra.mxu0 0
    %524 = vmatpush.bf16.msra.mxu0 0
    %525 = vmatpush.bf16.msra.mxu0 0
    %526 = vmatpush.bf16.msra.mxu0 0
    %527 = vmatpush.bf16.msra.mxu0 %v518
    %528 = vmatmul.bf16.gmra.mxu0 %v515
    %v529 = vpop.f32.mrf.mxu0
    %v530 = vadd.f32 0.0, %v529
    %v531 = vpop.f32.mrf.mxu0
    %532 = vdwg.mxu0
    %533 = vrot.lane.b32.xlu0 %v129, 40
    %v534 = vpop.permute.xlu0 %533
    %v536 = vsel %vm107, %v511, 0
    %v539 = vsel %vm180, %v534, 0
    %541 = vmatpush.bf16.msra.mxu0 0
    %542 = vmatpush.bf16.msra.mxu0 0
    %543 = vmatpush.bf16.msra.mxu0 0
    %544 = vmatpush.bf16.msra.mxu0 0
    %545 = vmatpush.bf16.msra.mxu0 0
    %546 = vmatpush.bf16.msra.mxu0 0
    %547 = vmatpush.bf16.msra.mxu0 0
    %548 = vmatpush.bf16.msra.mxu0 %v539
    %549 = vmatmul.bf16.gmra.mxu0 %v536
    %v550 = vpop.f32.mrf.mxu0
    %v551 = vadd.f32 0.0, %v550
    %v552 = vpop.f32.mrf.mxu0
    %553 = vdwg.mxu0
    %556 = vrot.lane.b32.xlu0 %v306, 8
    %v557 = vpop.permute.xlu0 %556
    %558 = vrot.lane.b32.xlu0 %v327, 8
    %v559 = vpop.permute.xlu0 %558
    %564 = vrot.lane.b32.xlu0 %v418, 16
    %v565 = vpop.permute.xlu0 %564
    %566 = vrot.lane.b32.xlu0 %v439, 16
    %v567 = vpop.permute.xlu0 %566
    %572 = vrot.lane.b32.xlu0 %v530, 24
    %v573 = vpop.permute.xlu0 %572
    %574 = vrot.lane.b32.xlu0 %v551, 24
    %v575 = vpop.permute.xlu0 %574
    %v578 = vsel %vm107, %v194, %v557
    %v579 = vsel %vm107, %v215, %v559
    %vm580 = vcmask 130048
    %v581 = vsel %vm580, %v578, %v565
    %v582 = vsel %vm580, %v579, %v567
    %vm583 = vcmask 195584
    %v584 = vsel %vm583, %v581, %v573
    %v585 = vsel %vm583, %v582, %v575
    %v586 = vpack.c.bf16 %v585, %v584
    %v587 = vld [vmem:[#allocation2] sm:$0xf]
    %v588 = vld [vmem:[#allocation2 + $0x4] sm:$0xf]
    %v589 = vld [vmem:[#allocation2 + $0x8] sm:$0xf]
    %v590 = vld [vmem:[#allocation2 + $0xc] sm:$0xf]
    %v591 = vld [vmem:[%s6] sm:$0x1]
    %v593 = vperm.slane %v591, 0
    %v599 = vunpack.c.l.b16 %v587
    %v600 = vunpack.c.l.b16 %v588
    %v601 = vunpack.c.l.b16 %v589
    %v602 = vunpack.c.l.b16 %v590
    %v603 = vpack.c.b16 %v600, %v599
    %v604 = vpack.c.b16 %v602, %v601
    %v608 = vsel %vm72, %v586, 0
    %610 = vmatpush.bf16.msra.mxu0 0
    %611 = vmatpush.bf16.msra.mxu0 0
    %612 = vmatpush.bf16.msra.mxu0 0
    %613 = vmatpush.bf16.msra.mxu0 0
    %614 = vmatpush.bf16.msra.mxu0 0
    %615 = vmatpush.bf16.msra.mxu0 0
    %616 = vmatpush.bf16.msra.mxu0 %v604
    %617 = vmatpush.bf16.msra.mxu0 %v603
    %618 = vmatmul.bf16.gmra.mxu0 %v608
    %v619 = vpop.f32.mrf.mxu0
    %v620 = vadd.f32 %v593, %v619
    %v621 = vpop.f32.mrf.mxu0
    %v622 = vadd.f32 %v593, %v621
    %623 = vdwg.mxu0
    %v624 = vadd.f32 %v49, %v620
    %v625 = vadd.f32 %v50, %v622
    %v626 = vld [vmem:[%s7] sm:$0x1]
    %v627 = vld [vmem:[%s8] sm:$0x1]
    %v628 = vsel %vm72, %v624, 0.0
    %629 = vadd.xlane.f32.xlu0 %v628
    %v630 = vpop.xlane.xlu0 %629
    %v631 = vsel %vm72, %v625, 0.0
    %632 = vadd.xlane.f32.xlu0 %v631
    %v633 = vpop.xlane.xlu0 %632
    %v634 = vrcp.pop 32.0
    %v635 = vmul.f32 32.0, %v634
    %v636 = vsub.f32 1.0, %v635
    %v637 = vmul.f32 %v634, %v636
    %v638 = vadd.f32 %v634, %v637
    %vm639 = vweird.f32 %v634
    %v640 = vsel %vm639, %v634, %v638
    %v641 = vmul.f32 %v630, %v640
    %v642 = vmul.f32 %v633, %v640
    %v643 = vsub.f32 %v624, %v641
    %v644 = vsub.f32 %v625, %v642
    %v645 = vmul.f32 %v643, %v643
    %v646 = vmul.f32 %v644, %v644
    %v647 = vsel %vm72, %v645, 0.0
    %648 = vadd.xlane.f32.xlu0 %v647
    %v649 = vpop.xlane.xlu0 %648
    %v650 = vsel %vm72, %v646, 0.0
    %651 = vadd.xlane.f32.xlu0 %v650
    %v652 = vpop.xlane.xlu0 %651
    %v653 = vmul.f32 %v649, %v640
    %v654 = vmul.f32 %v652, %v640
    %v655 = vadd.f32 %v653, 1e-05
    %v656 = vadd.f32 %v654, 1e-05
    %v657 = vrsqrt.pop %v655
    %v658 = vmul.f32 %v657, %v655
    %v659 = vmul.f32 %v658, %v657
    %v660 = vmul.f32 0.5, %v659
    %v661 = vsub.f32 1.5, %v660
    %v662 = vmul.f32 %v657, %v661
    %vm663 = vweird.f32 %v655
    %vm664 = vweird.f32 %v657
    %vm665 = vmor %vm663, %vm664
    %v666 = vsel %vm665, %v657, %v662
    %v667 = vrsqrt.pop %v656
    %v668 = vmul.f32 %v667, %v656
    %v669 = vmul.f32 %v668, %v667
    %v670 = vmul.f32 0.5, %v669
    %v671 = vsub.f32 1.5, %v670
    %v672 = vmul.f32 %v667, %v671
    %vm673 = vweird.f32 %v656
    %vm674 = vweird.f32 %v667
    %vm675 = vmor %vm673, %vm674
    %v676 = vsel %vm675, %v667, %v672
    %v677 = vmul.f32 %v643, %v666
    %v678 = vmul.f32 %v644, %v676
    %v680 = vperm.slane %v626, 0
    %v682 = vmul.f32 %v677, %v680
    %v683 = vmul.f32 %v678, %v680
    %v685 = vperm.slane %v627, 0
    %v687 = vadd.f32 %v682, %v685
    %v688 = vadd.f32 %v683, %v685
    %689 = vst.msk [vmem:[%s9] sm:$0xff] %vm72, %v687
    %690 = vst.msk [vmem:[%s9 + $0x8] sm:$0xff] %vm72, %v688
    // Predicated region
    $region42: #{decoder_layer_forward.3} parent=1 // pred_check
      _
    $region43: #{decoder_layer_forward.3} parent=1 // pred_check_branch
      %692 = sbr.rel (0) target = $region45
    $region44: #{decoder_layer_forward.3} parent=1 // pred_region
      _
    $region45: #{decoder_layer_forward.3} parent=1 // pred_fallthru
      _
    // Predicated region
    $region46: #{decoder_layer_forward.3} parent=1 // pred_check
      _
    $region47: #{decoder_layer_forward.3} parent=1 // pred_check_branch
      %694 = sbr.rel (0) target = $region49
    $region48: #{decoder_layer_forward.3} parent=1 // pred_region
      _
    $region49: #{decoder_layer_forward.3} parent=1 // pred_fallthru
      _
    %695 = vsyncpa [#allocation3], 1

// kernel: decoder_layer_forward.4
$region0: #{decoder_layer_forward.4}
  #allocation0 [shape = 'u32[]', space=smem, size = 0x4, offset = 0x4, fixed_abs, tag = 'smem constant byte address 0x4 - core index']
  #allocation1 [shape = 'u32[72,128]{1,0:T(1,128)}', space=vmem, size = 0x9000, scoped, tag = 'internal scratch']
  %s0 = inlined_call_operand.vmem [shape: f32[2,8,32], index: 0, kind: input, shape index: {}]
  %s1 = inlined_call_operand.vmem [shape: f32[2,10,32], index: 1, kind: input, shape index: {}]
  %s2 = inlined_call_operand.vmem [shape: bf16[32,32], index: 2, kind: input, shape index: {}]
  %s3 = inlined_call_operand.vmem [shape: f32[1,32], index: 3, kind: input, shape index: {}]
  %s4 = inlined_call_operand.vmem [shape: bf16[32,64], index: 4, kind: input, shape index: {}]
  %s5 = inlined_call_operand.vmem [shape: f32[1,64], index: 5, kind: input, shape index: {}]
  %s6 = inlined_call_operand.hbm [shape: bf16[32,32], index: 6, kind: input, shape index: {}]
  %s7 = inlined_call_operand.vmem [shape: f32[1,32], index: 7, kind: input, shape index: {}]
  %s8 = inlined_call_operand.vmem [shape: f32[1,32], index: 8, kind: input, shape index: {}]
  %s9 = inlined_call_operand.vmem [shape: f32[1,32], index: 9, kind: input, shape index: {}]
  %s10 = inlined_call_operand.vmem [shape: f32[2,8,32], index: 10, kind: output, shape index: {0}]
  %s11 = inlined_call_operand.vmem [shape: f32[4,2,8,10], index: 11, kind: output, shape index: {1}]
  %12 = xla_tuple %s10, %s11
  %s13 = sld [smem:[#allocation0]]
  $region62: #{decoder_layer_forward.4} parent=0
    _
  %s15 = ssub.s32 1, %s13
  %s16 = scalar_select 0, %s15, %s13
  $region1: #{decoder_layer_forward.4} parent=0
    #allocation2 [shape = 'u8[8192]{0}', space=vmem, size = 0x2000, scoped, tag = 'input window, operand 6, single buffered']
    #allocation3 [shape = 's32[1]{0}', space=sflag, size = 0x4, scoped, tag = 'scoped memory for decoder_layer_forward.4']
    %17 = vsyncpa [#allocation3], 0
    // Predicated region
    $region2: #{decoder_layer_forward.4} parent=1 // pred_check
      _
    $region3: #{decoder_layer_forward.4} parent=1 // pred_check_branch
      %19 = sbr.rel (0) target = $region5
    $region4: #{decoder_layer_forward.4} parent=1 // pred_region
      _
    $region5: #{decoder_layer_forward.4} parent=1 // pred_fallthru
      _
    // Predicated region
    $region6: #{decoder_layer_forward.4} parent=1 // pred_check
      _
    $region7: #{decoder_layer_forward.4} parent=1 // pred_check_branch
      %21 = sbr.rel (0) target = $region9
    $region8: #{decoder_layer_forward.4} parent=1 // pred_region
      _
    $region9: #{decoder_layer_forward.4} parent=1 // pred_fallthru
      _
    // Predicated region
    $region10: #{decoder_layer_forward.4} parent=1 // pred_check
      _
    $region11: #{decoder_layer_forward.4} parent=1 // pred_check_branch
      %23 = sbr.rel (0) target = $region13
    $region12: #{decoder_layer_forward.4} parent=1 // pred_region
      _
    $region13: #{decoder_layer_forward.4} parent=1 // pred_fallthru
      _
    // Predicated region
    $region14: #{decoder_layer_forward.4} parent=1 // pred_check
      _
    $region15: #{decoder_layer_forward.4} parent=1 // pred_check_branch
      %25 = sbr.rel (0) target = $region17
    $region16: #{decoder_layer_forward.4} parent=1 // pred_region
      _
    $region17: #{decoder_layer_forward.4} parent=1 // pred_fallthru
      _
    // Predicated region
    $region18: #{decoder_layer_forward.4} parent=1 // pred_check
      _
    $region19: #{decoder_layer_forward.4} parent=1 // pred_check_branch
      %27 = sbr.rel (0) target = $region21
    $region20: #{decoder_layer_forward.4} parent=1 // pred_region
      _
    $region21: #{decoder_layer_forward.4} parent=1 // pred_fallthru
      _
    // Predicated region
    $region22: #{decoder_layer_forward.4} parent=1 // pred_check
      _
    $region23: #{decoder_layer_forward.4} parent=1 // pred_check_branch
      %29 = sbr.rel (0) target = $region25
    $region24: #{decoder_layer_forward.4} parent=1 // pred_region
      _
    $region25: #{decoder_layer_forward.4} parent=1 // pred_fallthru
      _
    // Predicated region
    $region26: #{decoder_layer_forward.4} parent=1 // pred_check
      _
    $region27: #{decoder_layer_forward.4} parent=1 // pred_check_branch
      %31 = sbr.rel (0) target = $region29
    $region28: #{decoder_layer_forward.4} parent=1 // pred_region
      %33 = vsyncadd [#allocation3], 0
      %s34 = sshll.u32 %s6, 4
      %s35 = int_to_ptr.hbm [resolvable:$true] %s34
      %s36 = sshll.u32 [#allocation2], 4
      %s37 = int_to_ptr.vmem [resolvable:$true] %s36
      %42 = dma.hbm_to_vmem [thread:$0]  %s35, 256, %s37, [#allocation3], 64, 64, 4
    $region29: #{decoder_layer_forward.4} parent=1 // pred_fallthru
      _
    // Predicated region
    $region30: #{decoder_layer_forward.4} parent=1 // pred_check
      _
    $region31: #{decoder_layer_forward.4} parent=1 // pred_check_branch
      %44 = sbr.rel (0) target = $region33
    $region32: #{decoder_layer_forward.4} parent=1 // pred_region
      _
    $region33: #{decoder_layer_forward.4} parent=1 // pred_fallthru
      _
    // Predicated region
    $region34: #{decoder_layer_forward.4} parent=1 // pred_check
      _
    $region35: #{decoder_layer_forward.4} parent=1 // pred_check_branch
      %46 = sbr.rel (0) target = $region37
    $region36: #{decoder_layer_forward.4} parent=1 // pred_region
      _
    $region37: #{decoder_layer_forward.4} parent=1 // pred_fallthru
      _
    // Predicated region
    $region38: #{decoder_layer_forward.4} parent=1 // pred_check
      _
    $region39: #{decoder_layer_forward.4} parent=1 // pred_check_branch
      %48 = sbr.rel (0) target = $region41
    $region40: #{decoder_layer_forward.4} parent=1 // pred_region
      _
    $region41: #{decoder_layer_forward.4} parent=1 // pred_fallthru
      _
    // Predicated region
    $region42: #{decoder_layer_forward.4} parent=1 // pred_check
      _
    $region43: #{decoder_layer_forward.4} parent=1 // pred_check_branch
      %50 = sbr.rel (0) target = $region45
    $region44: #{decoder_layer_forward.4} parent=1 // pred_region
      %52 = dma.done [#allocation3], 256
    $region45: #{decoder_layer_forward.4} parent=1 // pred_fallthru
      _
    %v54 = vld [vmem:[%s0] sm:$0xff]
    %v55 = vld [vmem:[%s0 + $0x8] sm:$0xff]
    %v56 = vld [vmem:[%s1] sm:$0xff]
    %v57 = vld [vmem:[%s1 + $0x8] sm:$0x3]
    %v58 = vld [vmem:[%s1 + $0x10] sm:$0xff]
    %v59 = vld [vmem:[%s1 + $0x18] sm:$0x3]
    %v64 = vrot.slane %v56, 2
    %v65 = vrot.slane %v56, 4
    %v66 = vrot.slane %v56, 6
    %v67 = vrot.slane %v58, 2
    %v68 = vrot.slane %v58, 4
    %v69 = vrot.slane %v58, 6
    %v70 = vpack.c.bf16 %v55, %v54
    %v71 = vld [vmem:[%s2] sm:$0xf]
    %v72 = vld [vmem:[%s2 + $0x4] sm:$0xf]
    %v73 = vld [vmem:[%s2 + $0x8] sm:$0xf]
    %v74 = vld [vmem:[%s2 + $0xc] sm:$0xf]
    %v75 = vld [vmem:[%s3] sm:$0x1]
    %v77 = vperm.slane %v75, 0
    %v83 = vunpack.c.l.b16 %v71
    %v84 = vunpack.c.l.b16 %v72
    %v85 = vunpack.c.l.b16 %v73
    %v86 = vunpack.c.l.b16 %v74
    %v87 = vpack.c.b16 %v84, %v83
    %v88 = vpack.c.b16 %v86, %v85
    %vm91 = vcmask 261120
    %v93 = vsel %vm91, %v70, 0
    %95 = vmatpush.bf16.msra.mxu0 0
    %96 = vmatpush.bf16.msra.mxu0 0
    %97 = vmatpush.bf16.msra.mxu0 0
    %98 = vmatpush.bf16.msra.mxu0 0
    %99 = vmatpush.bf16.msra.mxu0 0
    %100 = vmatpush.bf16.msra.mxu0 0
    %101 = vmatpush.bf16.msra.mxu0 %v88
    %102 = vmatpush.bf16.msra.mxu0 %v87
    %103 = vmatmul.bf16.gmra.mxu0 %v93
    %v104 = vpop.f32.mrf.mxu0
    %v105 = vadd.f32 %v77, %v104
    %v106 = vpop.f32.mrf.mxu0
    %v107 = vadd.f32 %v77, %v106
    %108 = vdwg.mxu0
    %109 = vst [vmem:[#allocation1] ss:$4 sm:$0xff] %v56
    %s110 = scalar_lea.vmem [#allocation1], 1
    %111 = vst [vmem:[%s110] ss:$4 sm:$0xff] %v64
    %s112 = scalar_lea.vmem [#allocation1], 2
    %113 = vst [vmem:[%s112] ss:$4 sm:$0xff] %v65
    %s114 = scalar_lea.vmem [#allocation1], 3
    %115 = vst [vmem:[%s114] ss:$4 sm:$0xff] %v66
    %s116 = scalar_lea.vmem [#allocation1], 32
    %117 = vst [vmem:[%s116] ss:$4 sm:$0xff] %v57
    %s118 = scalar_lea.vmem [#allocation1], 33
    %119 = vst [vmem:[%s118] ss:$4 sm:$0xff] %v58
    %s120 = scalar_lea.vmem [#allocation1], 34
    %121 = vst [vmem:[%s120] ss:$4 sm:$0xff] %v67
    %s122 = scalar_lea.vmem [#allocation1], 35
    %123 = vst [vmem:[%s122] ss:$4 sm:$0xff] %v68
    %v124 = vld.sshfl [vmem:[#allocation1] sm:$0xff pattern:$0x73625140]
    %v125 = vld.sshfl [vmem:[#allocation1 + $0x20] sm:$0xff pattern:$0x73625140]
    %126 = vst [vmem:[#allocation1] ss:$4 sm:$0xff] %v69
    %127 = vst [vmem:[%s110] ss:$4 sm:$0xff] %v59
    %v128 = vld.sshfl [vmem:[#allocation1] sm:$0xff pattern:$0x73625140]
    %v132 = vpack.c.bf16 %v125, %v124
    %v133 = vpack.c.bf16 %v128, %v128
    %v134 = vld [vmem:[%s4] sm:$0xf]
    %v135 = vld [vmem:[%s4 + $0x4] sm:$0xf]
    %v136 = vld [vmem:[%s4 + $0x8] sm:$0xf]
    %v137 = vld [vmem:[%s4 + $0xc] sm:$0xf]
    %v138 = vld [vmem:[%s5] sm:$0x1]
    %v140 = vperm.slane %v138, 0
    %v146 = vunpack.c.l.b16 %v134
    %v147 = vunpack.c.l.b16 %v135
    %v148 = vunpack.c.l.b16 %v136
    %v149 = vunpack.c.l.b16 %v137
    %v150 = vpack.c.b16 %v147, %v146
    %v151 = vpack.c.b16 %v149, %v148
    %v155 = vsel %vm91, %v132, 0
    %v158 = vsel %vm91, %v133, 0
    %160 = vmatpush.bf16.msra.mxu0 0
    %161 = vmatpush.bf16.msra.mxu0 0
    %162 = vmatpush.bf16.msra.mxu0 0
    %163 = vmatpush.bf16.msra.mxu0 0
    %164 = vmatpush.bf16.msra.mxu0 0
    %165 = vmatpush.bf16.msra.mxu0 0
    %166 = vmatpush.bf16.msra.mxu0 %v151
    %167 = vmatpush.bf16.msra.mxu0 %v150
    %168 = vmatmul.bf16.gmra.mxu0 %v155
    %v169 = vpop.f32.mrf.mxu0
    %v170 = vadd.f32 %v140, %v169
    %v171 = vpop.f32.mrf.mxu0
    %v172 = vadd.f32 %v140, %v171
    %173 = vmatmul.bf16.gmra.mxu0 %v158
    %v174 = vpop.f32.mrf.mxu0
    %v175 = vadd.f32 %v140, %v174
    %v176 = vpop.f32.mrf.mxu0
    %177 = vdwg.mxu0
    %v181 = vrot.slane %v170, 2
    %v182 = vrot.slane %v170, 4
    %v183 = vrot.slane %v170, 6
    %v184 = vrot.slane %v172, 2
    %v185 = vrot.slane %v172, 4
    %v186 = vrot.slane %v172, 6
    %v187 = vrot.slane %v175, 2
    %v188 = vpack.c.bf16 %v105, %v105
    %v189 = vpack.c.bf16 %v107, %v107
    %190 = vst [vmem:[#allocation1] ss:$4 sm:$0xff] %v170
    %s191 = scalar_lea.vmem [#allocation1], 1
    %192 = vst [vmem:[%s191] ss:$4 sm:$0xff] %v181
    %s193 = scalar_lea.vmem [#allocation1], 2
    %194 = vst [vmem:[%s193] ss:$4 sm:$0xff] %v182
    %s195 = scalar_lea.vmem [#allocation1], 3
    %196 = vst [vmem:[%s195] ss:$4 sm:$0xff] %v183
    %s197 = scalar_lea.vmem [#allocation1], 32
    %198 = vst [vmem:[%s197] ss:$4 sm:$0xff] %v172
    %v199 = vld.sshfl [vmem:[#allocation1] sm:$0xff pattern:$0x73625140]
    %v200 = vld.sshfl [vmem:[#allocation1 + $0x20] sm:$0xff pattern:$0x73625140]
    %201 = vst [vmem:[#allocation1] ss:$4 sm:$0xff] %v184
    %202 = vst [vmem:[%s191] ss:$4 sm:$0xff] %v185
    %203 = vst [vmem:[%s193] ss:$4 sm:$0xff] %v186
    %204 = vst [vmem:[%s195] ss:$4 sm:$0xff] %v175
    %205 = vst [vmem:[%s197] ss:$4 sm:$0xff] %v187
    %v206 = vld.sshfl [vmem:[#allocation1] sm:$0xff pattern:$0x73625140]
    %v207 = vld.sshfl [vmem:[#allocation1 + $0x20] sm:$0xff pattern:$0x73625140]
    %v212 = vpack.c.bf16 %v199, %v199
    %v213 = vpack.c.bf16 %v200, %v200
    %v214 = vpack.c.bf16 %v206, %v206
    %v215 = vpack.c.bf16 %v207, %v207
    %216 = vst [vmem:[#allocation1] ss:$4 sm:$0xff] %v170
    %s217 = scalar_lea.vmem [#allocation1], 1
    %218 = vst [vmem:[%s217] ss:$4 sm:$0xff] %v181
    %s219 = scalar_lea.vmem [#allocation1], 2
    %220 = vst [vmem:[%s219] ss:$4 sm:$0xff] %v182
    %s221 = scalar_lea.vmem [#allocation1], 3
    %222 = vst [vmem:[%s221] ss:$4 sm:$0xff] %v183
    %s223 = scalar_lea.vmem [#allocation1], 32
    %224 = vst [vmem:[%s223] ss:$4 sm:$0xff] %v172
    %v225 = vld.sshfl [vmem:[#allocation1] sm:$0xff pattern:$0x73625140]
    %v226 = vld.sshfl [vmem:[#allocation1 + $0x20] sm:$0xff pattern:$0x73625140]
    %227 = vst [vmem:[#allocation1] ss:$4 sm:$0xff] %v184
    %228 = vst [vmem:[%s217] ss:$4 sm:$0xff] %v185
    %229 = vst [vmem:[%s219] ss:$4 sm:$0xff] %v186
    %230 = vst [vmem:[%s221] ss:$4 sm:$0xff] %v175
    %231 = vst [vmem:[%s223] ss:$4 sm:$0xff] %v187
    %v232 = vld.sshfl [vmem:[#allocation1] sm:$0xff pattern:$0x73625140]
    %v233 = vld.sshfl [vmem:[#allocation1 + $0x20] sm:$0xff pattern:$0x73625140]
    %v238 = vpack.c.bf16 %v225, %v225
    %v239 = vpack.c.bf16 %v226, %v226
    %v240 = vpack.c.bf16 %v232, %v232
    %v241 = vpack.c.bf16 %v233, %v233
    %v244 = vunpack.c.l.b16 %v212
    %v245 = vunpack.c.l.b16 %v213
    %v246 = vpack.c.b16 %v245, %v244
    %vm247 = vcmask 64512
    %v249 = vsel %vm247, %v188, 0
    %v252 = vsel %vm247, %v246, 0
    %254 = vmatpush.bf16.xpose.msra.mxu0 0
    %255 = vmatpush.bf16.xpose.msra.mxu0 0
    %256 = vmatpush.bf16.xpose.msra.mxu0 0
    %257 = vmatpush.bf16.xpose.msra.mxu0 0
    %258 = vmatpush.bf16.xpose.msra.mxu0 0
    %259 = vmatpush.bf16.xpose.msra.mxu0 0
    %260 = vmatpush.bf16.xpose.msra.mxu0 0
    %261 = vmatpush.bf16.xpose.msra.mxu0 %v252
    %262 = vmatmul.bf16.gmra.mxu0 %v249
    %v263 = vpop.f32.mrf.mxu0
    %v264 = vadd.f32 0.0, %v263
    %v265 = vpop.f32.mrf.mxu0
    %266 = vdwg.mxu0
    %v269 = vunpack.c.l.b16 %v214
    %v270 = vunpack.c.l.b16 %v215
    %v271 = vpack.c.b16 %v270, %v269
    %v273 = vsel %vm247, %v189, 0
    %v276 = vsel %vm247, %v271, 0
    %278 = vmatpush.bf16.xpose.msra.mxu0 0
    %279 = vmatpush.bf16.xpose.msra.mxu0 0
    %280 = vmatpush.bf16.xpose.msra.mxu0 0
    %281 = vmatpush.bf16.xpose.msra.mxu0 0
    %282 = vmatpush.bf16.xpose.msra.mxu0 0
    %283 = vmatpush.bf16.xpose.msra.mxu0 0
    %284 = vmatpush.bf16.xpose.msra.mxu0 0
    %285 = vmatpush.bf16.xpose.msra.mxu0 %v276
    %286 = vmatmul.bf16.gmra.mxu0 %v273
    %v287 = vpop.f32.mrf.mxu0
    %v288 = vadd.f32 0.0, %v287
    %v289 = vpop.f32.mrf.mxu0
    %290 = vdwg.mxu0
    %vm291 = vcmask 80896
    %v292 = vsel %vm291, %v264, -inf
    %293 = vmax.xlane.f32.xlu0 %v292
    %v294 = vpop.xlane.xlu0 %293
    %v295 = vsel %vm291, %v288, -inf
    %296 = vmax.xlane.f32.xlu0 %v295
    %v297 = vpop.xlane.xlu0 %296
    %v298 = vsub.f32 %v264, %v294
    %v299 = vsub.f32 %v288, %v297
    %v300 = vmul.f32 %v298, 1.442695
    %v301 = vpow.pop %v300
    %v302 = vmul.f32 %v299, 1.442695
    %v303 = vpow.pop %v302
    %v304 = vsel %vm291, %v301, 0.0
    %305 = vadd.xlane.f32.xlu0 %v304
    %v306 = vpop.xlane.xlu0 %305
    %v307 = vsel %vm291, %v303, 0.0
    %308 = vadd.xlane.f32.xlu0 %v307
    %v309 = vpop.xlane.xlu0 %308
    %v310 = vrcp.pop %v306
    %v311 = vrcp.pop %v309
    %v312 = vmul.f32 %v301, %v310
    %v313 = vmul.f32 %v303, %v311
    %314 = vst.msk [vmem:[%s11] sm:$0xff] %vm291, %v312
    %315 = vst.msk [vmem:[%s11 + $0x8] sm:$0xff] %vm291, %v313
    %v316 = vpack.c.bf16 %v312, %v312
    %v317 = vpack.c.bf16 %v313, %v313
    %v320 = vunpack.c.l.b16 %v238
    %v321 = vunpack.c.l.b16 %v239
    %v322 = vpack.c.b16 %v321, %v320
    %323 = vrot.lane.b32.xlu0 %v322, 96
    %v324 = vpop.permute.xlu0 %323
    %v326 = vsel %vm291, %v316, 0
    %vm328 = vcmask 1044480
    %v330 = vsel %vm328, %v324, 0
    %332 = vmatpush.bf16.msra.mxu0 0
    %333 = vmatpush.bf16.msra.mxu0 0
    %334 = vmatpush.bf16.msra.mxu0 0
    %335 = vmatpush.bf16.msra.mxu0 0
    %336 = vmatpush.bf16.msra.mxu0 0
    %337 = vmatpush.bf16.msra.mxu0 0
    %338 = vmatpush.bf16.msra.mxu0 0
    %339 = vmatpush.bf16.msra.mxu0 %v330
    %340 = vmatmul.bf16.gmra.mxu0 %v326
    %v341 = vpop.f32.mrf.mxu0
    %v342 = vadd.f32 0.0, %v341
    %v343 = vpop.f32.mrf.mxu0
    %344 = vdwg.mxu0
    %v347 = vunpack.c.l.b16 %v240
    %v348 = vunpack.c.l.b16 %v241
    %v349 = vpack.c.b16 %v348, %v347
    %350 = vrot.lane.b32.xlu0 %v349, 96
    %v351 = vpop.permute.xlu0 %350
    %v353 = vsel %vm291, %v317, 0
    %v356 = vsel %vm328, %v351, 0
    %358 = vmatpush.bf16.msra.mxu0 0
    %359 = vmatpush.bf16.msra.mxu0 0
    %360 = vmatpush.bf16.msra.mxu0 0
    %361 = vmatpush.bf16.msra.mxu0 0
    %362 = vmatpush.bf16.msra.mxu0 0
    %363 = vmatpush.bf16.msra.mxu0 0
    %364 = vmatpush.bf16.msra.mxu0 0
    %365 = vmatpush.bf16.msra.mxu0 %v356
    %366 = vmatmul.bf16.gmra.mxu0 %v353
    %v367 = vpop.f32.mrf.mxu0
    %v368 = vadd.f32 0.0, %v367
    %v369 = vpop.f32.mrf.mxu0
    %370 = vdwg.mxu0
    %371 = vst [vmem:[#allocation1] ss:$4 sm:$0xff] %v170
    %s372 = scalar_lea.vmem [#allocation1], 1
    %373 = vst [vmem:[%s372] ss:$4 sm:$0xff] %v181
    %s374 = scalar_lea.vmem [#allocation1], 2
    %375 = vst [vmem:[%s374] ss:$4 sm:$0xff] %v182
    %s376 = scalar_lea.vmem [#allocation1], 3
    %377 = vst [vmem:[%s376] ss:$4 sm:$0xff] %v183
    %s378 = scalar_lea.vmem [#allocation1], 32
    %379 = vst [vmem:[%s378] ss:$4 sm:$0xff] %v172
    %v380 = vld.sshfl [vmem:[#allocation1] sm:$0xff pattern:$0x73625140]
    %v381 = vld.sshfl [vmem:[#allocation1 + $0x20] sm:$0xff pattern:$0x73625140]
    %382 = vst [vmem:[#allocation1] ss:$4 sm:$0xff] %v184
    %383 = vst [vmem:[%s372] ss:$4 sm:$0xff] %v185
    %384 = vst [vmem:[%s374] ss:$4 sm:$0xff] %v186
    %385 = vst [vmem:[%s376] ss:$4 sm:$0xff] %v175
    %386 = vst [vmem:[%s378] ss:$4 sm:$0xff] %v187
    %v387 = vld.sshfl [vmem:[#allocation1] sm:$0xff pattern:$0x73625140]
    %v388 = vld.sshfl [vmem:[#allocation1 + $0x20] sm:$0xff pattern:$0x73625140]
    %v393 = vpack.c.bf16 %v380, %v380
    %v394 = vpack.c.bf16 %v381, %v381
    %v395 = vpack.c.bf16 %v387, %v387
    %v396 = vpack.c.bf16 %v388, %v388
    %397 = vst [vmem:[#allocation1] ss:$4 sm:$0xff] %v170
    %s398 = scalar_lea.vmem [#allocation1], 1
    %399 = vst [vmem:[%s398] ss:$4 sm:$0xff] %v181
    %s400 = scalar_lea.vmem [#allocation1], 2
    %401 = vst [vmem:[%s400] ss:$4 sm:$0xff] %v182
    %s402 = scalar_lea.vmem [#allocation1], 3
    %403 = vst [vmem:[%s402] ss:$4 sm:$0xff] %v183
    %s404 = scalar_lea.vmem [#allocation1], 32
    %405 = vst [vmem:[%s404] ss:$4 sm:$0xff] %v172
    %v406 = vld.sshfl [vmem:[#allocation1] sm:$0xff pattern:$0x73625140]
    %v407 = vld.sshfl [vmem:[#allocation1 + $0x20] sm:$0xff pattern:$0x73625140]
    %408 = vst [vmem:[#allocation1] ss:$4 sm:$0xff] %v184
    %409 = vst [vmem:[%s398] ss:$4 sm:$0xff] %v185
    %410 = vst [vmem:[%s400] ss:$4 sm:$0xff] %v186
    %411 = vst [vmem:[%s402] ss:$4 sm:$0xff] %v175
    %412 = vst [vmem:[%s404] ss:$4 sm:$0xff] %v187
    %v413 = vld.sshfl [vmem:[#allocation1] sm:$0xff pattern:$0x73625140]
    %v414 = vld.sshfl [vmem:[#allocation1 + $0x20] sm:$0xff pattern:$0x73625140]
    %v419 = vpack.c.bf16 %v406, %v406
    %v420 = vpack.c.bf16 %v407, %v407
    %v421 = vpack.c.bf16 %v413, %v413
    %v422 = vpack.c.bf16 %v414, %v414
    %v424 = vunpack.c.l.b16 %v188
    %v425 = vpack.c.b16 %v424, %v424
    %426 = vrot.lane.b32.xlu0 %v425, 120
    %v427 = vpop.permute.xlu0 %426
    %v430 = vunpack.c.l.b16 %v393
    %v431 = vunpack.c.l.b16 %v394
    %v432 = vpack.c.b16 %v431, %v430
    %433 = vrot.lane.b32.xlu0 %v432, 120
    %v434 = vpop.permute.xlu0 %433
    %v436 = vsel %vm247, %v427, 0
    %v439 = vsel %vm247, %v434, 0
    %441 = vmatpush.bf16.xpose.msra.mxu0 0
    %442 = vmatpush.bf16.xpose.msra.mxu0 0
    %443 = vmatpush.bf16.xpose.msra.mxu0 0
    %444 = vmatpush.bf16.xpose.msra.mxu0 0
    %445 = vmatpush.bf16.xpose.msra.mxu0 0
    %446 = vmatpush.bf16.xpose.msra.mxu0 0
    %447 = vmatpush.bf16.xpose.msra.mxu0 0
    %448 = vmatpush.bf16.xpose.msra.mxu0 %v439
    %449 = vmatmul.bf16.gmra.mxu0 %v436
    %v450 = vpop.f32.mrf.mxu0
    %v451 = vadd.f32 0.0, %v450
    %v452 = vpop.f32.mrf.mxu0
    %453 = vdwg.mxu0
    %v455 = vunpack.c.l.b16 %v189
    %v456 = vpack.c.b16 %v455, %v455
    %457 = vrot.lane.b32.xlu0 %v456, 120
    %v458 = vpop.permute.xlu0 %457
    %v461 = vunpack.c.l.b16 %v395
    %v462 = vunpack.c.l.b16 %v396
    %v463 = vpack.c.b16 %v462, %v461
    %464 = vrot.lane.b32.xlu0 %v463, 120
    %v465 = vpop.permute.xlu0 %464
    %v467 = vsel %vm247, %v458, 0
    %v470 = vsel %vm247, %v465, 0
    %472 = vmatpush.bf16.xpose.msra.mxu0 0
    %473 = vmatpush.bf16.xpose.msra.mxu0 0
    %474 = vmatpush.bf16.xpose.msra.mxu0 0
    %475 = vmatpush.bf16.xpose.msra.mxu0 0
    %476 = vmatpush.bf16.xpose.msra.mxu0 0
    %477 = vmatpush.bf16.xpose.msra.mxu0 0
    %478 = vmatpush.bf16.xpose.msra.mxu0 0
    %479 = vmatpush.bf16.xpose.msra.mxu0 %v470
    %480 = vmatmul.bf16.gmra.mxu0 %v467
    %v481 = vpop.f32.mrf.mxu0
    %v482 = vadd.f32 0.0, %v481
    %v483 = vpop.f32.mrf.mxu0
    %484 = vdwg.mxu0
    %v485 = vsel %vm291, %v451, -inf
    %486 = vmax.xlane.f32.xlu0 %v485
    %v487 = vpop.xlane.xlu0 %486
    %v488 = vsel %vm291, %v482, -inf
    %489 = vmax.xlane.f32.xlu0 %v488
    %v490 = vpop.xlane.xlu0 %489
    %v491 = vsub.f32 %v451, %v487
    %v492 = vsub.f32 %v482, %v490
    %v493 = vmul.f32 %v491, 1.442695
    %v494 = vpow.pop %v493
    %v495 = vmul.f32 %v492, 1.442695
    %v496 = vpow.pop %v495
    %v497 = vsel %vm291, %v494, 0.0
    %498 = vadd.xlane.f32.xlu0 %v497
    %v499 = vpop.xlane.xlu0 %498
    %v500 = vsel %vm291, %v496, 0.0
    %501 = vadd.xlane.f32.xlu0 %v500
    %v502 = vpop.xlane.xlu0 %501
    %v503 = vrcp.pop %v499
    %v504 = vrcp.pop %v502
    %v505 = vmul.f32 %v494, %v503
    %v506 = vmul.f32 %v496, %v504
    %s507 = scalar_lea.vmem %s11, 16
    %508 = vst.msk [vmem:[%s507] sm:$0xff] %vm291, %v505
    %509 = vst.msk [vmem:[%s507 + $0x8] sm:$0xff] %vm291, %v506
    %v510 = vpack.c.bf16 %v505, %v505
    %v511 = vpack.c.bf16 %v506, %v506
    %v514 = vunpack.c.l.b16 %v419
    %v515 = vunpack.c.l.b16 %v420
    %v516 = vpack.c.b16 %v515, %v514
    %517 = vrot.lane.b32.xlu0 %v516, 88
    %v518 = vpop.permute.xlu0 %517
    %v520 = vsel %vm291, %v510, 0
    %v523 = vsel %vm328, %v518, 0
    %525 = vmatpush.bf16.msra.mxu0 0
    %526 = vmatpush.bf16.msra.mxu0 0
    %527 = vmatpush.bf16.msra.mxu0 0
    %528 = vmatpush.bf16.msra.mxu0 0
    %529 = vmatpush.bf16.msra.mxu0 0
    %530 = vmatpush.bf16.msra.mxu0 0
    %531 = vmatpush.bf16.msra.mxu0 0
    %532 = vmatpush.bf16.msra.mxu0 %v523
    %533 = vmatmul.bf16.gmra.mxu0 %v520
    %v534 = vpop.f32.mrf.mxu0
    %v535 = vadd.f32 0.0, %v534
    %v536 = vpop.f32.mrf.mxu0
    %537 = vdwg.mxu0
    %v540 = vunpack.c.l.b16 %v421
    %v541 = vunpack.c.l.b16 %v422
    %v542 = vpack.c.b16 %v541, %v540
    %543 = vrot.lane.b32.xlu0 %v542, 88
    %v544 = vpop.permute.xlu0 %543
    %v546 = vsel %vm291, %v511, 0
    %v549 = vsel %vm328, %v544, 0
    %551 = vmatpush.bf16.msra.mxu0 0
    %552 = vmatpush.bf16.msra.mxu0 0
    %553 = vmatpush.bf16.msra.mxu0 0
    %554 = vmatpush.bf16.msra.mxu0 0
    %555 = vmatpush.bf16.msra.mxu0 0
    %556 = vmatpush.bf16.msra.mxu0 0
    %557 = vmatpush.bf16.msra.mxu0 0
    %558 = vmatpush.bf16.msra.mxu0 %v549
    %559 = vmatmul.bf16.gmra.mxu0 %v546
    %v560 = vpop.f32.mrf.mxu0
    %v561 = vadd.f32 0.0, %v560
    %v562 = vpop.f32.mrf.mxu0
    %563 = vdwg.mxu0
    %564 = vst [vmem:[#allocation1] ss:$4 sm:$0xff] %v170
    %s565 = scalar_lea.vmem [#allocation1], 1
    %566 = vst [vmem:[%s565] ss:$4 sm:$0xff] %v181
    %s567 = scalar_lea.vmem [#allocation1], 2
    %568 = vst [vmem:[%s567] ss:$4 sm:$0xff] %v182
    %s569 = scalar_lea.vmem [#allocation1], 3
    %570 = vst [vmem:[%s569] ss:$4 sm:$0xff] %v183
    %s571 = scalar_lea.vmem [#allocation1], 32
    %572 = vst [vmem:[%s571] ss:$4 sm:$0xff] %v172
    %v573 = vld.sshfl [vmem:[#allocation1] sm:$0xff pattern:$0x73625140]
    %v574 = vld.sshfl [vmem:[#allocation1 + $0x20] sm:$0xff pattern:$0x73625140]
    %575 = vst [vmem:[#allocation1] ss:$4 sm:$0xff] %v184
    %576 = vst [vmem:[%s565] ss:$4 sm:$0xff] %v185
    %577 = vst [vmem:[%s567] ss:$4 sm:$0xff] %v186
    %578 = vst [vmem:[%s569] ss:$4 sm:$0xff] %v175
    %579 = vst [vmem:[%s571] ss:$4 sm:$0xff] %v187
    %v580 = vld.sshfl [vmem:[#allocation1] sm:$0xff pattern:$0x73625140]
    %v581 = vld.sshfl [vmem:[#allocation1 + $0x20] sm:$0xff pattern:$0x73625140]
    %v586 = vpack.c.bf16 %v573, %v573
    %v587 = vpack.c.bf16 %v574, %v574
    %v588 = vpack.c.bf16 %v580, %v580
    %v589 = vpack.c.bf16 %v581, %v581
    %590 = vst [vmem:[#allocation1] ss:$4 sm:$0xff] %v170
    %s591 = scalar_lea.vmem [#allocation1], 1
    %592 = vst [vmem:[%s591] ss:$4 sm:$0xff] %v181
    %s593 = scalar_lea.vmem [#allocation1], 2
    %594 = vst [vmem:[%s593] ss:$4 sm:$0xff] %v182
    %s595 = scalar_lea.vmem [#allocation1], 3
    %596 = vst [vmem:[%s595] ss:$4 sm:$0xff] %v183
    %s597 = scalar_lea.vmem [#allocation1], 32
    %598 = vst [vmem:[%s597] ss:$4 sm:$0xff] %v172
    %v599 = vld.sshfl [vmem:[#allocation1] sm:$0xff pattern:$0x73625140]
    %v600 = vld.sshfl [vmem:[#allocation1 + $0x20] sm:$0xff pattern:$0x73625140]
    %601 = vst [vmem:[#allocation1] ss:$4 sm:$0xff] %v184
    %602 = vst [vmem:[%s591] ss:$4 sm:$0xff] %v185
    %603 = vst [vmem:[%s593] ss:$4 sm:$0xff] %v186
    %604 = vst [vmem:[%s595] ss:$4 sm:$0xff] %v175
    %605 = vst [vmem:[%s597] ss:$4 sm:$0xff] %v187
    %v606 = vld.sshfl [vmem:[#allocation1] sm:$0xff pattern:$0x73625140]
    %v607 = vld.sshfl [vmem:[#allocation1 + $0x20] sm:$0xff pattern:$0x73625140]
    %v612 = vpack.c.bf16 %v599, %v599
    %v613 = vpack.c.bf16 %v600, %v600
    %v614 = vpack.c.bf16 %v606, %v606
    %v615 = vpack.c.bf16 %v607, %v607
    %616 = vrot.lane.b32.xlu0 %v425, 112
    %v617 = vpop.permute.xlu0 %616
    %v620 = vunpack.c.l.b16 %v586
    %v621 = vunpack.c.l.b16 %v587
    %v622 = vpack.c.b16 %v621, %v620
    %623 = vrot.lane.b32.xlu0 %v622, 112
    %v624 = vpop.permute.xlu0 %623
    %v626 = vsel %vm247, %v617, 0
    %v629 = vsel %vm247, %v624, 0
    %631 = vmatpush.bf16.xpose.msra.mxu0 0
    %632 = vmatpush.bf16.xpose.msra.mxu0 0
    %633 = vmatpush.bf16.xpose.msra.mxu0 0
    %634 = vmatpush.bf16.xpose.msra.mxu0 0
    %635 = vmatpush.bf16.xpose.msra.mxu0 0
    %636 = vmatpush.bf16.xpose.msra.mxu0 0
    %637 = vmatpush.bf16.xpose.msra.mxu0 0
    %638 = vmatpush.bf16.xpose.msra.mxu0 %v629
    %639 = vmatmul.bf16.gmra.mxu0 %v626
    %v640 = vpop.f32.mrf.mxu0
    %v641 = vadd.f32 0.0, %v640
    %v642 = vpop.f32.mrf.mxu0
    %643 = vdwg.mxu0
    %644 = vrot.lane.b32.xlu0 %v456, 112
    %v645 = vpop.permute.xlu0 %644
    %v648 = vunpack.c.l.b16 %v588
    %v649 = vunpack.c.l.b16 %v589
    %v650 = vpack.c.b16 %v649, %v648
    %651 = vrot.lane.b32.xlu0 %v650, 112
    %v652 = vpop.permute.xlu0 %651
    %v654 = vsel %vm247, %v645, 0
    %v657 = vsel %vm247, %v652, 0
    %659 = vmatpush.bf16.xpose.msra.mxu0 0
    %660 = vmatpush.bf16.xpose.msra.mxu0 0
    %661 = vmatpush.bf16.xpose.msra.mxu0 0
    %662 = vmatpush.bf16.xpose.msra.mxu0 0
    %663 = vmatpush.bf16.xpose.msra.mxu0 0
    %664 = vmatpush.bf16.xpose.msra.mxu0 0
    %665 = vmatpush.bf16.xpose.msra.mxu0 0
    %666 = vmatpush.bf16.xpose.msra.mxu0 %v657
    %667 = vmatmul.bf16.gmra.mxu0 %v654
    %v668 = vpop.f32.mrf.mxu0
    %v669 = vadd.f32 0.0, %v668
    %v670 = vpop.f32.mrf.mxu0
    %671 = vdwg.mxu0
    %v672 = vsel %vm291, %v641, -inf
    %673 = vmax.xlane.f32.xlu0 %v672
    %v674 = vpop.xlane.xlu0 %673
    %v675 = vsel %vm291, %v669, -inf
    %676 = vmax.xlane.f32.xlu0 %v675
    %v677 = vpop.xlane.xlu0 %676
    %v678 = vsub.f32 %v641, %v674
    %v679 = vsub.f32 %v669, %v677
    %v680 = vmul.f32 %v678, 1.442695
    %v681 = vpow.pop %v680
    %v682 = vmul.f32 %v679, 1.442695
    %v683 = vpow.pop %v682
    %v684 = vsel %vm291, %v681, 0.0
    %685 = vadd.xlane.f32.xlu0 %v684
    %v686 = vpop.xlane.xlu0 %685
    %v687 = vsel %vm291, %v683, 0.0
    %688 = vadd.xlane.f32.xlu0 %v687
    %v689 = vpop.xlane.xlu0 %688
    %v690 = vrcp.pop %v686
    %v691 = vrcp.pop %v689
    %v692 = vmul.f32 %v681, %v690
    %v693 = vmul.f32 %v683, %v691
    %s694 = scalar_lea.vmem %s11, 32
    %695 = vst.msk [vmem:[%s694] sm:$0xff] %vm291, %v692
    %696 = vst.msk [vmem:[%s694 + $0x8] sm:$0xff] %vm291, %v693
    %v697 = vpack.c.bf16 %v692, %v692
    %v698 = vpack.c.bf16 %v693, %v693
    %v701 = vunpack.c.l.b16 %v612
    %v702 = vunpack.c.l.b16 %v613
    %v703 = vpack.c.b16 %v702, %v701
    %704 = vrot.lane.b32.xlu0 %v703, 80
    %v705 = vpop.permute.xlu0 %704
    %v707 = vsel %vm291, %v697, 0
    %v710 = vsel %vm328, %v705, 0
    %712 = vmatpush.bf16.msra.mxu0 0
    %713 = vmatpush.bf16.msra.mxu0 0
    %714 = vmatpush.bf16.msra.mxu0 0
    %715 = vmatpush.bf16.msra.mxu0 0
    %716 = vmatpush.bf16.msra.mxu0 0
    %717 = vmatpush.bf16.msra.mxu0 0
    %718 = vmatpush.bf16.msra.mxu0 0
    %719 = vmatpush.bf16.msra.mxu0 %v710
    %720 = vmatmul.bf16.gmra.mxu0 %v707
    %v721 = vpop.f32.mrf.mxu0
    %v722 = vadd.f32 0.0, %v721
    %v723 = vpop.f32.mrf.mxu0
    %724 = vdwg.mxu0
    %v727 = vunpack.c.l.b16 %v614
    %v728 = vunpack.c.l.b16 %v615
    %v729 = vpack.c.b16 %v728, %v727
    %730 = vrot.lane.b32.xlu0 %v729, 80
    %v731 = vpop.permute.xlu0 %730
    %v733 = vsel %vm291, %v698, 0
    %v736 = vsel %vm328, %v731, 0
    %738 = vmatpush.bf16.msra.mxu0 0
    %739 = vmatpush.bf16.msra.mxu0 0
    %740 = vmatpush.bf16.msra.mxu0 0
    %741 = vmatpush.bf16.msra.mxu0 0
    %742 = vmatpush.bf16.msra.mxu0 0
    %743 = vmatpush.bf16.msra.mxu0 0
    %744 = vmatpush.bf16.msra.mxu0 0
    %745 = vmatpush.bf16.msra.mxu0 %v736
    %746 = vmatmul.bf16.gmra.mxu0 %v733
    %v747 = vpop.f32.mrf.mxu0
    %v748 = vadd.f32 0.0, %v747
    %v749 = vpop.f32.mrf.mxu0
    %750 = vdwg.mxu0
    %751 = vst [vmem:[#allocation1] ss:$4 sm:$0xff] %v170
    %s752 = scalar_lea.vmem [#allocation1], 1
    %753 = vst [vmem:[%s752] ss:$4 sm:$0xff] %v181
    %s754 = scalar_lea.vmem [#allocation1], 2
    %755 = vst [vmem:[%s754] ss:$4 sm:$0xff] %v182
    %s756 = scalar_lea.vmem [#allocation1], 3
    %757 = vst [vmem:[%s756] ss:$4 sm:$0xff] %v183
    %s758 = scalar_lea.vmem [#allocation1], 32
    %759 = vst [vmem:[%s758] ss:$4 sm:$0xff] %v172
    %v760 = vld.sshfl [vmem:[#allocation1] sm:$0xff pattern:$0x73625140]
    %v761 = vld.sshfl [vmem:[#allocation1 + $0x20] sm:$0xff pattern:$0x73625140]
    %762 = vst [vmem:[#allocation1] ss:$4 sm:$0xff] %v184
    %763 = vst [vmem:[%s752] ss:$4 sm:$0xff] %v185
    %764 = vst [vmem:[%s754] ss:$4 sm:$0xff] %v186
    %765 = vst [vmem:[%s756] ss:$4 sm:$0xff] %v175
    %766 = vst [vmem:[%s758] ss:$4 sm:$0xff] %v187
    %v767 = vld.sshfl [vmem:[#allocation1] sm:$0xff pattern:$0x73625140]
    %v768 = vld.sshfl [vmem:[#allocation1 + $0x20] sm:$0xff pattern:$0x73625140]
    %v773 = vpack.c.bf16 %v760, %v760
    %v774 = vpack.c.bf16 %v761, %v761
    %v775 = vpack.c.bf16 %v767, %v767
    %v776 = vpack.c.bf16 %v768, %v768
    %777 = vst [vmem:[#allocation1] ss:$4 sm:$0xff] %v170
    %s778 = scalar_lea.vmem [#allocation1], 1
    %779 = vst [vmem:[%s778] ss:$4 sm:$0xff] %v181
    %s780 = scalar_lea.vmem [#allocation1], 2
    %781 = vst [vmem:[%s780] ss:$4 sm:$0xff] %v182
    %s782 = scalar_lea.vmem [#allocation1], 3
    %783 = vst [vmem:[%s782] ss:$4 sm:$0xff] %v183
    %s784 = scalar_lea.vmem [#allocation1], 32
    %785 = vst [vmem:[%s784] ss:$4 sm:$0xff] %v172
    %v786 = vld.sshfl [vmem:[#allocation1] sm:$0xff pattern:$0x73625140]
    %v787 = vld.sshfl [vmem:[#allocation1 + $0x20] sm:$0xff pattern:$0x73625140]
    %788 = vst [vmem:[#allocation1] ss:$4 sm:$0xff] %v184
    %789 = vst [vmem:[%s778] ss:$4 sm:$0xff] %v185
    %790 = vst [vmem:[%s780] ss:$4 sm:$0xff] %v186
    %791 = vst [vmem:[%s782] ss:$4 sm:$0xff] %v175
    %792 = vst [vmem:[%s784] ss:$4 sm:$0xff] %v187
    %v793 = vld.sshfl [vmem:[#allocation1] sm:$0xff pattern:$0x73625140]
    %v794 = vld.sshfl [vmem:[#allocation1 + $0x20] sm:$0xff pattern:$0x73625140]
    %v799 = vpack.c.bf16 %v786, %v786
    %v800 = vpack.c.bf16 %v787, %v787
    %v801 = vpack.c.bf16 %v793, %v793
    %v802 = vpack.c.bf16 %v794, %v794
    %803 = vrot.lane.b32.xlu0 %v425, 104
    %v804 = vpop.permute.xlu0 %803
    %v807 = vunpack.c.l.b16 %v773
    %v808 = vunpack.c.l.b16 %v774
    %v809 = vpack.c.b16 %v808, %v807
    %810 = vrot.lane.b32.xlu0 %v809, 104
    %v811 = vpop.permute.xlu0 %810
    %v813 = vsel %vm247, %v804, 0
    %v816 = vsel %vm247, %v811, 0
    %818 = vmatpush.bf16.xpose.msra.mxu0 0
    %819 = vmatpush.bf16.xpose.msra.mxu0 0
    %820 = vmatpush.bf16.xpose.msra.mxu0 0
    %821 = vmatpush.bf16.xpose.msra.mxu0 0
    %822 = vmatpush.bf16.xpose.msra.mxu0 0
    %823 = vmatpush.bf16.xpose.msra.mxu0 0
    %824 = vmatpush.bf16.xpose.msra.mxu0 0
    %825 = vmatpush.bf16.xpose.msra.mxu0 %v816
    %826 = vmatmul.bf16.gmra.mxu0 %v813
    %v827 = vpop.f32.mrf.mxu0
    %v828 = vadd.f32 0.0, %v827
    %v829 = vpop.f32.mrf.mxu0
    %830 = vdwg.mxu0
    %831 = vrot.lane.b32.xlu0 %v456, 104
    %v832 = vpop.permute.xlu0 %831
    %v835 = vunpack.c.l.b16 %v775
    %v836 = vunpack.c.l.b16 %v776
    %v837 = vpack.c.b16 %v836, %v835
    %838 = vrot.lane.b32.xlu0 %v837, 104
    %v839 = vpop.permute.xlu0 %838
    %v841 = vsel %vm247, %v832, 0
    %v844 = vsel %vm247, %v839, 0
    %846 = vmatpush.bf16.xpose.msra.mxu0 0
    %847 = vmatpush.bf16.xpose.msra.mxu0 0
    %848 = vmatpush.bf16.xpose.msra.mxu0 0
    %849 = vmatpush.bf16.xpose.msra.mxu0 0
    %850 = vmatpush.bf16.xpose.msra.mxu0 0
    %851 = vmatpush.bf16.xpose.msra.mxu0 0
    %852 = vmatpush.bf16.xpose.msra.mxu0 0
    %853 = vmatpush.bf16.xpose.msra.mxu0 %v844
    %854 = vmatmul.bf16.gmra.mxu0 %v841
    %v855 = vpop.f32.mrf.mxu0
    %v856 = vadd.f32 0.0, %v855
    %v857 = vpop.f32.mrf.mxu0
    %858 = vdwg.mxu0
    %v859 = vsel %vm291, %v828, -inf
    %860 = vmax.xlane.f32.xlu0 %v859
    %v861 = vpop.xlane.xlu0 %860
    %v862 = vsel %vm291, %v856, -inf
    %863 = vmax.xlane.f32.xlu0 %v862
    %v864 = vpop.xlane.xlu0 %863
    %v865 = vsub.f32 %v828, %v861
    %v866 = vsub.f32 %v856, %v864
    %v867 = vmul.f32 %v865, 1.442695
    %v868 = vpow.pop %v867
    %v869 = vmul.f32 %v866, 1.442695
    %v870 = vpow.pop %v869
    %v871 = vsel %vm291, %v868, 0.0
    %872 = vadd.xlane.f32.xlu0 %v871
    %v873 = vpop.xlane.xlu0 %872
    %v874 = vsel %vm291, %v870, 0.0
    %875 = vadd.xlane.f32.xlu0 %v874
    %v876 = vpop.xlane.xlu0 %875
    %v877 = vrcp.pop %v873
    %v878 = vrcp.pop %v876
    %v879 = vmul.f32 %v868, %v877
    %v880 = vmul.f32 %v870, %v878
    %s881 = scalar_lea.vmem %s11, 48
    %882 = vst.msk [vmem:[%s881] sm:$0xff] %vm291, %v879
    %883 = vst.msk [vmem:[%s881 + $0x8] sm:$0xff] %vm291, %v880
    %v884 = vpack.c.bf16 %v879, %v879
    %v885 = vpack.c.bf16 %v880, %v880
    %v888 = vunpack.c.l.b16 %v799
    %v889 = vunpack.c.l.b16 %v800
    %v890 = vpack.c.b16 %v889, %v888
    %891 = vrot.lane.b32.xlu0 %v890, 72
    %v892 = vpop.permute.xlu0 %891
    %v894 = vsel %vm291, %v884, 0
    %v897 = vsel %vm328, %v892, 0
    %899 = vmatpush.bf16.msra.mxu0 0
    %900 = vmatpush.bf16.msra.mxu0 0
    %901 = vmatpush.bf16.msra.mxu0 0
    %902 = vmatpush.bf16.msra.mxu0 0
    %903 = vmatpush.bf16.msra.mxu0 0
    %904 = vmatpush.bf16.msra.mxu0 0
    %905 = vmatpush.bf16.msra.mxu0 0
    %906 = vmatpush.bf16.msra.mxu0 %v897
    %907 = vmatmul.bf16.gmra.mxu0 %v894
    %v908 = vpop.f32.mrf.mxu0
    %v909 = vadd.f32 0.0, %v908
    %v910 = vpop.f32.mrf.mxu0
    %911 = vdwg.mxu0
    %v914 = vunpack.c.l.b16 %v801
    %v915 = vunpack.c.l.b16 %v802
    %v916 = vpack.c.b16 %v915, %v914
    %917 = vrot.lane.b32.xlu0 %v916, 72
    %v918 = vpop.permute.xlu0 %917
    %v920 = vsel %vm291, %v885, 0
    %v923 = vsel %vm328, %v918, 0
    %925 = vmatpush.bf16.msra.mxu0 0
    %926 = vmatpush.bf16.msra.mxu0 0
    %927 = vmatpush.bf16.msra.mxu0 0
    %928 = vmatpush.bf16.msra.mxu0 0
    %929 = vmatpush.bf16.msra.mxu0 0
    %930 = vmatpush.bf16.msra.mxu0 0
    %931 = vmatpush.bf16.msra.mxu0 0
    %932 = vmatpush.bf16.msra.mxu0 %v923
    %933 = vmatmul.bf16.gmra.mxu0 %v920
    %v934 = vpop.f32.mrf.mxu0
    %v935 = vadd.f32 0.0, %v934
    %v936 = vpop.f32.mrf.mxu0
    %937 = vdwg.mxu0
    %940 = vrot.lane.b32.xlu0 %v535, 8
    %v941 = vpop.permute.xlu0 %940
    %942 = vrot.lane.b32.xlu0 %v561, 8
    %v943 = vpop.permute.xlu0 %942
    %948 = vrot.lane.b32.xlu0 %v722, 16
    %v949 = vpop.permute.xlu0 %948
    %950 = vrot.lane.b32.xlu0 %v748, 16
    %v951 = vpop.permute.xlu0 %950
    %956 = vrot.lane.b32.xlu0 %v909, 24
    %v957 = vpop.permute.xlu0 %956
    %958 = vrot.lane.b32.xlu0 %v935, 24
    %v959 = vpop.permute.xlu0 %958
    %v962 = vsel %vm247, %v342, %v941
    %v963 = vsel %vm247, %v368, %v943
    %vm964 = vcmask 130048
    %v965 = vsel %vm964, %v962, %v949
    %v966 = vsel %vm964, %v963, %v951
    %vm967 = vcmask 195584
    %v968 = vsel %vm967, %v965, %v957
    %v969 = vsel %vm967, %v966, %v959
    %v970 = vpack.c.bf16 %v969, %v968
    %v971 = vld [vmem:[#allocation2] sm:$0xf]
    %v972 = vld [vmem:[#allocation2 + $0x4] sm:$0xf]
    %v973 = vld [vmem:[#allocation2 + $0x8] sm:$0xf]
    %v974 = vld [vmem:[#allocation2 + $0xc] sm:$0xf]
    %v975 = vld [vmem:[%s7] sm:$0x1]
    %v977 = vperm.slane %v975, 0
    %v983 = vunpack.c.l.b16 %v971
    %v984 = vunpack.c.l.b16 %v972
    %v985 = vunpack.c.l.b16 %v973
    %v986 = vunpack.c.l.b16 %v974
    %v987 = vpack.c.b16 %v984, %v983
    %v988 = vpack.c.b16 %v986, %v985
    %v992 = vsel %vm91, %v970, 0
    %994 = vmatpush.bf16.msra.mxu0 0
    %995 = vmatpush.bf16.msra.mxu0 0
    %996 = vmatpush.bf16.msra.mxu0 0
    %997 = vmatpush.bf16.msra.mxu0 0
    %998 = vmatpush.bf16.msra.mxu0 0
    %999 = vmatpush.bf16.msra.mxu0 0
    %1000 = vmatpush.bf16.msra.mxu0 %v988
    %1001 = vmatpush.bf16.msra.mxu0 %v987
    %1002 = vmatmul.bf16.gmra.mxu0 %v992
    %v1003 = vpop.f32.mrf.mxu0
    %v1004 = vadd.f32 %v977, %v1003
    %v1005 = vpop.f32.mrf.mxu0
    %v1006 = vadd.f32 %v977, %v1005
    %1007 = vdwg.mxu0
    %v1008 = vadd.f32 %v54, %v1004
    %v1009 = vadd.f32 %v55, %v1006
    %v1010 = vld [vmem:[%s8] sm:$0x1]
    %v1011 = vld [vmem:[%s9] sm:$0x1]
    %v1012 = vsel %vm91, %v1008, 0.0
    %1013 = vadd.xlane.f32.xlu0 %v1012
    %v1014 = vpop.xlane.xlu0 %1013
    %v1015 = vsel %vm91, %v1009, 0.0
    %1016 = vadd.xlane.f32.xlu0 %v1015
    %v1017 = vpop.xlane.xlu0 %1016
    %v1018 = vrcp.pop 32.0
    %v1019 = vmul.f32 32.0, %v1018
    %v1020 = vsub.f32 1.0, %v1019
    %v1021 = vmul.f32 %v1018, %v1020
    %v1022 = vadd.f32 %v1018, %v1021
    %vm1023 = vweird.f32 %v1018
    %v1024 = vsel %vm1023, %v1018, %v1022
    %v1025 = vmul.f32 %v1014, %v1024
    %v1026 = vmul.f32 %v1017, %v1024
    %v1027 = vsub.f32 %v1008, %v1025
    %v1028 = vsub.f32 %v1009, %v1026
    %v1029 = vmul.f32 %v1027, %v1027
    %v1030 = vmul.f32 %v1028, %v1028
    %v1031 = vsel %vm91, %v1029, 0.0
    %1032 = vadd.xlane.f32.xlu0 %v1031
    %v1033 = vpop.xlane.xlu0 %1032
    %v1034 = vsel %vm91, %v1030, 0.0
    %1035 = vadd.xlane.f32.xlu0 %v1034
    %v1036 = vpop.xlane.xlu0 %1035
    %v1037 = vmul.f32 %v1033, %v1024
    %v1038 = vmul.f32 %v1036, %v1024
    %v1039 = vadd.f32 %v1037, 1e-05
    %v1040 = vadd.f32 %v1038, 1e-05
    %v1041 = vrsqrt.pop %v1039
    %v1042 = vmul.f32 %v1041, %v1039
    %v1043 = vmul.f32 %v1042, %v1041
    %v1044 = vmul.f32 0.5, %v1043
    %v1045 = vsub.f32 1.5, %v1044
    %v1046 = vmul.f32 %v1041, %v1045
    %vm1047 = vweird.f32 %v1039
    %vm1048 = vweird.f32 %v1041
    %vm1049 = vmor %vm1047, %vm1048
    %v1050 = vsel %vm1049, %v1041, %v1046
    %v1051 = vrsqrt.pop %v1040
    %v1052 = vmul.f32 %v1051, %v1040
    %v1053 = vmul.f32 %v1052, %v1051
    %v1054 = vmul.f32 0.5, %v1053
    %v1055 = vsub.f32 1.5, %v1054
    %v1056 = vmul.f32 %v1051, %v1055
    %vm1057 = vweird.f32 %v1040
    %vm1058 = vweird.f32 %v1051
    %vm1059 = vmor %vm1057, %vm1058
    %v1060 = vsel %vm1059, %v1051, %v1056
    %v1061 = vmul.f32 %v1027, %v1050
    %v1062 = vmul.f32 %v1028, %v1060
    %v1064 = vperm.slane %v1010, 0
    %v1066 = vmul.f32 %v1061, %v1064
    %v1067 = vmul.f32 %v1062, %v1064
    %v1069 = vperm.slane %v1011, 0
    %v1071 = vadd.f32 %v1066, %v1069
    %v1072 = vadd.f32 %v1067, %v1069
    %1073 = vst.msk [vmem:[%s10] sm:$0xff] %vm91, %v1071
    %1074 = vst.msk [vmem:[%s10 + $0x8] sm:$0xff] %vm91, %v1072
    // Predicated region
    $region46: #{decoder_layer_forward.4} parent=1 // pred_check
      _
    $region47: #{decoder_layer_forward.4} parent=1 // pred_check_branch
      %1076 = sbr.rel (0) target = $region49
    $region48: #{decoder_layer_forward.4} parent=1 // pred_region
      _
    $region49: #{decoder_layer_forward.4} parent=1 // pred_fallthru
      _
    // Predicated region
    $region50: #{decoder_layer_forward.4} parent=1 // pred_check
      _
    $region51: #{decoder_layer_forward.4} parent=1 // pred_check_branch
      %1078 = sbr.rel (0) target = $region53
    $region52: #{decoder_layer_forward.4} parent=1 // pred_region
      _
    $region53: #{decoder_layer_forward.4} parent=1 // pred_fallthru
      _
    // Predicated region
    $region54: #{decoder_layer_forward.4} parent=1 // pred_check
      _
    $region55: #{decoder_layer_forward.4} parent=1 // pred_check_branch
      %1080 = sbr.rel (0) target = $region57
    $region56: #{decoder_layer_forward.4} parent=1 // pred_region
      _
    $region57: #{decoder_layer_forward.4} parent=1 // pred_fallthru
      _
    // Predicated region
    $region58: #{decoder_layer_forward.4} parent=1 // pred_check
      _
    $region59: #{decoder_layer_forward.4} parent=1 // pred_check_branch
      %1082 = sbr.rel (0) target = $region61
    $region60: #{decoder_layer_forward.4} parent=1 // pred_region
      _
    $region61: #{decoder_layer_forward.4} parent=1 // pred_fallthru
      _
    %1083 = vsyncpa [#allocation3], 1

</llo_original>
